<compile_context>
chip_gen: v7x
topology: tpu7x:2x2x1
jax: 0.10.0
libtpu: 0.0.40
codegen_flags: <defaults>
</compile_context>

<pallas_src>
import math
from functools import partial

import jax
import jax.numpy as jnp
from jax import lax
from jax.experimental import pallas as pl
from jax.experimental.pallas import tpu as pltpu


# ------------------------------ VMEM budget ------------------------------

def _default_vmem_limit():
    try:
        cap = pltpu.get_tpu_info().vmem_capacity_bytes
    except Exception:
        cap = 64 * 1024 * 1024          # conservative (v7x-sized) fallback
    # leave headroom: ~48 MiB on 64 MiB parts, ~96 MiB on 128 MiB parts
    return max(32 * 1024 * 1024, min(100 * 1024 * 1024, (cap * 3) // 4))


_VMEM_LIMIT = _default_vmem_limit()


# ------------------------------ Pallas kernels ------------------------------

def _attn_block_kernel(y_ref, m_ref, g1_ref, b1_ref, wqkv_ref, bqkv_ref,
                       wnq_ref, bnq_ref, wo_ref, bo_ref, o_ref, ctx_ref,
                       *, n_head, nq):
    """Whole attention branch (ln_1 -> attn -> out_proj -> +residual), per batch."""
    f32 = jnp.float32
    bf16 = jnp.bfloat16

    y = y_ref[0].astype(f32)                                   # (seq, d)
    seq, d = y.shape
    L = seq - nq
    hd = d // n_head

    # ---- ln_1 (f32 statistics, eps = 1e-5, torch default) ----
    mu = jnp.mean(y, axis=-1, keepdims=True)
    var = jnp.mean((y - mu) ** 2, axis=-1, keepdims=True)
    x = (y - mu) * lax.rsqrt(var + 1e-5) * g1_ref[...] + b1_ref[...]
    x_bf = x.astype(bf16)

    # ---- projections (no wasted rows):
    #   [q|k|v] over the L "real" tokens (reference uses query[nq:] only),
    #   new_q over the nq query tokens.  1/sqrt(hd) already folded into
    #   the q / new_q weights & biases at parameter-prep time.
    qkv = jnp.dot(x_bf[nq:, :], wqkv_ref[...],
                  preferred_element_type=f32) + bqkv_ref[...]        # (L, 3d)
    q_clip = qkv[:, 0 * d:1 * d]                                      # scaled q
    k = qkv[:, 1 * d:2 * d]
    v = qkv[:, 2 * d:3 * d]
    new_q = jnp.dot(x_bf[:nq, :], wnq_ref[...],
                    preferred_element_type=f32) + bnq_ref[...]        # (nq, d)

    # queries: mask-branch rows first, clip-branch rows after (reference concat order)
    queries = jnp.concatenate([new_q, q_clip], axis=0)                # (seq, d)

    # additive mask over the L keys: user mask on the first nq rows, 0 elsewhere.
    # (-1e30 instead of -inf keeps degenerate fully-masked rows NaN-free.)
    madd = jnp.concatenate([m_ref[0], jnp.zeros((L, L), f32)], axis=0)  # (seq, L)

    q_bf = queries.astype(bf16)
    k_bf = k.astype(bf16)
    v_bf = v.astype(bf16)

    for h in range(n_head):                                           # unrolled
        sl = slice(h * hd, (h + 1) * hd)
        # scores: (seq, hd) . (L, hd)^T -> (seq, L), f32 accumulate
        s = lax.dot_general(q_bf[:, sl], k_bf[:, sl],
                            (((1,), (1,)), ((), ())),
                            preferred_element_type=f32) + madd
        m = jnp.max(s, axis=-1, keepdims=True)
        e = jnp.exp(s - m)                                            # <= 1, bf16-safe
        denom = jnp.sum(e, axis=-1, keepdims=True)                    # (seq, 1)
        # deferred normalization: (seq,hd) multiply instead of (seq,L)
        ctx = jnp.dot(e.astype(bf16), v_bf[:, sl],
                      preferred_element_type=f32)                     # (seq, hd)
        ctx = ctx * pl.reciprocal(denom, approx=True)
        ctx_ref[:, sl] = ctx.astype(bf16)       # sink -> bounds per-head live range

    # fused K=d out-projection (single full-depth MXU pass) + residual.
    attn_out = jnp.dot(ctx_ref[...], wo_ref[...],
                       preferred_element_type=f32) + bo_ref[...]
    o_ref[0] = (y + attn_out).astype(o_ref.dtype)


def _mlp_block_kernel(y_ref, g2_ref, b2_ref, wfc_ref, bfc_ref,
                      wpj_ref, bpj_ref, o_ref):
    """Whole MLP branch (ln_2 -> c_fc -> QuickGELU -> c_proj -> +residual)."""
    f32 = jnp.float32
    bf16 = jnp.bfloat16

    y = y_ref[...].astype(f32)                                        # (tile, d)
    mu = jnp.mean(y, axis=-1, keepdims=True)
    var = jnp.mean((y - mu) ** 2, axis=-1, keepdims=True)
    z = (y - mu) * lax.rsqrt(var + 1e-5) * g2_ref[...] + b2_ref[...]

    h = jnp.dot(z.astype(bf16), wfc_ref[...],
                preferred_element_type=f32) + bfc_ref[...]            # (tile, 4d) f32

    # QuickGELU with a bf16 gate (EUP bf16 on v6e/v7x; upcast-lowered on v5e).
    hb = h.astype(bf16)
    gate = 1.0 / (1.0 + jnp.exp(-1.702 * hb))                         # stays bf16
    h_act = hb * gate                                                 # bf16 -> MXU input

    out = y + jnp.dot(h_act, wpj_ref[...],
                      preferred_element_type=f32) + bpj_ref[...]
    o_ref[...] = out.astype(o_ref.dtype)


# ------------------------------ Pallas wrappers ------------------------------

def _full_spec(arr):
    """Full-array block, resident across the grid (constant index map)."""
    idx = (0,) * arr.ndim
    return pl.BlockSpec(arr.shape, lambda *_: idx)
    # NOTE: these blocks never change index; Pallas re-uses the fetched copy.


def attention_block(y_b, mask_add, prm, n_head, nq):
    bs, seq, d = y_b.shape
    L = seq - nq
    kernel = partial(_attn_block_kernel, n_head=n_head, nq=nq)
    args = (y_b, mask_add, prm["ln1_g"], prm["ln1_b"],
            prm["w_qkv"], prm["b_qkv"], prm["w_newq"], prm["b_newq"],
            prm["w_out"], prm["b_out"])
    in_specs = ([pl.BlockSpec((1, seq, d), lambda b: (b, 0, 0)),
                 pl.BlockSpec((1, nq, L), lambda b: (b, 0, 0))]
                + [_full_spec(a) for a in args[2:]])
    return pl.pallas_call(
        kernel,
        grid=(bs,),
        out_shape=jax.ShapeDtypeStruct((bs, seq, d), y_b.dtype),
        in_specs=in_specs,
        out_specs=pl.BlockSpec((1, seq, d), lambda b: (b, 0, 0)),
        scratch_shapes=[pltpu.VMEM((seq, d), jnp.bfloat16)],
        compiler_params=pltpu.CompilerParams(
            dimension_semantics=("parallel",),
            vmem_limit_bytes=_VMEM_LIMIT),
    )(*args)


def _row_tile(n, cap=256):
    # cap=256 keeps the (tile, 4d) f32 intermediate + resident weights inside
    # the v7x 64 MiB VMEM budget; still near roofline on v5e/v6e.
    if n <= cap:
        return n
    t = cap
    while t >= 8:
        if n % t == 0:
            return t
        t -= 8
    return cap  # ragged final tile: Pallas masks the partial writeback


def mlp_block(y2d, prm):
    n, d = y2d.shape
    tile = _row_tile(n)
    args = (y2d, prm["ln2_g"], prm["ln2_b"], prm["w_fc"], prm["b_fc"],
            prm["w_proj"], prm["b_proj"])
    in_specs = ([pl.BlockSpec((tile, d), lambda i: (i, 0))]
                + [_full_spec(a) for a in args[1:]])
    return pl.pallas_call(
        _mlp_block_kernel,
        grid=(pl.cdiv(n, tile),),
        out_shape=jax.ShapeDtypeStruct((n, d), y2d.dtype),
        in_specs=in_specs,
        out_specs=pl.BlockSpec((tile, d), lambda i: (i, 0)),
        compiler_params=pltpu.CompilerParams(
            dimension_semantics=("parallel",),
            vmem_limit_bytes=_VMEM_LIMIT),
    )(*args)


# ------------------------------ parameters ------------------------------

def init_block_params(key, d):
    """Raw parameters in PyTorch layout (Linear weight = (out, in))."""
    keys = jax.random.split(key, 8)
    s = 0.02
    f32 = jnp.float32
    return {
        "in_proj_w": jax.random.normal(keys[0], (3 * d, d), f32) * s,
        "in_proj_b": jax.random.normal(keys[1], (3 * d,), f32) * s,
        "new_q_w": jax.random.normal(keys[2], (d, d), f32) * s,
        "new_q_b": jnp.zeros((d,), f32),
        "out_w": jax.random.normal(keys[3], (d, d), f32) * s,
        "out_b": jnp.zeros((d,), f32),
        "ln1_g": jnp.ones((d,), f32),
        "ln1_b": jnp.zeros((d,), f32),
        "fc_w": jax.random.normal(keys[4], (4 * d, d), f32) * s,
        "fc_b": jax.random.normal(keys[5], (4 * d,), f32) * s,
        "proj_w": jax.random.normal(keys[6], (d, 4 * d), f32) * s,
        "proj_b": jax.random.normal(keys[7], (d,), f32) * s,
        "ln2_g": jnp.ones((d,), f32),
        "ln2_b": jnp.zeros((d,), f32),
    }


def prepare_block_params(raw, n_head):
    """PyTorch layout -> kernel layout: pre-transposed, scale-folded, bf16 weights."""
    d = raw["ln1_g"].shape[0]
    hd = d // n_head
    scale = 1.0 / math.sqrt(hd)
    bf16, f32 = jnp.bfloat16, jnp.float32

    wq, wk, wv = jnp.split(raw["in_proj_w"], 3, axis=0)   # (d, d) each, (out, in)
    bq, bk, bv = jnp.split(raw["in_proj_b"], 3)
    # fold 1/sqrt(hd) into q / new_q weights & biases; pre-transpose to (Din, Dout)
    w_qkv = jnp.concatenate([wq * scale, wk, wv], axis=0).T          # (d, 3d)
    b_qkv = jnp.concatenate([bq * scale, bk, bv])[None, :]
    w_newq = (raw["new_q_w"] * scale).T                               # (d, d)
    b_newq = (raw["new_q_b"] * scale)[None, :]

    return {
        "ln1_g": raw["ln1_g"][None, :].astype(f32),
        "ln1_b": raw["ln1_b"][None, :].astype(f32),
        "w_qkv": w_qkv.astype(bf16),
        "b_qkv": b_qkv.astype(f32),
        "w_newq": w_newq.astype(bf16),
        "b_newq": b_newq.astype(f32),
        "w_out": raw["out_w"].T.astype(bf16),            # (d, d), un-split
        "b_out": raw["out_b"][None, :].astype(f32),
        "ln2_g": raw["ln2_g"][None, :].astype(f32),
        "ln2_b": raw["ln2_b"][None, :].astype(f32),
        "w_fc": raw["fc_w"].T.astype(bf16),              # (d, 4d)
        "b_fc": raw["fc_b"][None, :].astype(f32),
        "w_proj": raw["proj_w"].T.astype(bf16),          # (4d, d)
        "b_proj": raw["proj_b"][None, :].astype(f32),
    }


# ------------------------------ model glue ------------------------------

def transformer_forward(y, attn_mask_bool, blocks, n_head):
    seq, bs, d = y.shape
    _, nq, L = attn_mask_bool.shape
    assert seq == nq + L

    # Batch-major residual stream for the whole stack (single transpose in/out).
    y_b = jnp.transpose(y, (1, 0, 2))                                 # (bs, seq, d)

    # Only the tiny (bs, nq, L) additive mask is shipped to the kernels; the
    # (seq, L) per-row mask is assembled in-kernel (no head/seq replication,
    # no (bs, seq, seq) HBM tensor).  -1e30 instead of -inf keeps degenerate
    # fully-masked rows finite.
    mask_add = jnp.where(attn_mask_bool, jnp.float32(-1e30), jnp.float32(0.0))

    for prm in blocks:
        y_b = attention_block(y_b, mask_add, prm, n_head, nq)
        y_b = mlp_block(y_b.reshape(bs * seq, d), prm).reshape(bs, seq, d)

    return jnp.transpose(y_b, (1, 0, 2))                              # (seq, bs, d)


# ------------------------------ main ------------------------------

if __name__ == "__main__":
    width, layers, heads, patch_size = 32, 2, 4, 16   # patch_size unused in fwd
    nq, L, bs = 4, 8, 2
    seq = nq + L

    key = jax.random.PRNGKey(0)
    k_y, k_m, k_p = jax.random.split(key, 3)

    y = jax.random.normal(k_y, (seq, bs, width), jnp.float32)
    attn_mask = jax.random.bernoulli(k_m, 0.3, (bs, nq, L))
    attn_mask = attn_mask.at[:, :, 0].set(False)   # avoid fully-masked rows

    raw_params = [init_block_params(k, width) for k in jax.random.split(k_p, layers)]
    blocks = [prepare_block_params(r, heads) for r in raw_params]

    # TODO(synk): .detach() on the q/k/v source and the need_weights=True path
    # (averaged mask_attn weights) are autograd/debug-only; the forward pass
    # implemented here (need_weights=False) is unaffected.
    fwd = jax.jit(lambda y_, m_, p_: transformer_forward(y_, m_, p_, heads))
    out = jax.block_until_ready(fwd(y, attn_mask, blocks))

    assert out.shape == (seq, bs, width)
    assert bool(jnp.all(jnp.isfinite(out)))
    print("KERNEL_OK")
</pallas_src>

<mosaic_0001>
module attributes {stable_mosaic.version = 11 : i64} {
  func.func @_attn_block_kernel(%arg0: i32, %arg1: memref<1x12x32xf32, #tpu.memory_space<vmem>>, %arg2: memref<1x4x8xf32, #tpu.memory_space<vmem>>, %arg3: memref<1x32xf32, #tpu.memory_space<vmem>>, %arg4: memref<1x32xf32, #tpu.memory_space<vmem>>, %arg5: memref<32x96xbf16, #tpu.memory_space<vmem>>, %arg6: memref<1x96xf32, #tpu.memory_space<vmem>>, %arg7: memref<32x32xbf16, #tpu.memory_space<vmem>>, %arg8: memref<1x32xf32, #tpu.memory_space<vmem>>, %arg9: memref<32x32xbf16, #tpu.memory_space<vmem>>, %arg10: memref<1x32xf32, #tpu.memory_space<vmem>>, %arg11: memref<1x12x32xf32, #tpu.memory_space<vmem>>, %arg12: memref<12x32xbf16, #tpu.memory_space<vmem>>) attributes {dimension_semantics = [#tpu.dimension_semantics<parallel>], iteration_bounds = array<i64: 2>, scalar_prefetch = 0 : i64, scratch_operands = 1 : i64, tpu.core_type = #tpu.core_type<tc>, window_params = [{transform_indices = @transform_0, window_bounds = array<i64: 1, 12, 32>}, {transform_indices = @transform_1, window_bounds = array<i64: 1, 4, 8>}, {pipeline_mode = #tpu.pipeline_mode<synchronous>, transform_indices = @transform_2, window_bounds = array<i64: 1, 32>}, {pipeline_mode = #tpu.pipeline_mode<synchronous>, transform_indices = @transform_3, window_bounds = array<i64: 1, 32>}, {pipeline_mode = #tpu.pipeline_mode<synchronous>, transform_indices = @transform_4, window_bounds = array<i64: 32, 96>}, {pipeline_mode = #tpu.pipeline_mode<synchronous>, transform_indices = @transform_5, window_bounds = array<i64: 1, 96>}, {pipeline_mode = #tpu.pipeline_mode<synchronous>, transform_indices = @transform_6, window_bounds = array<i64: 32, 32>}, {pipeline_mode = #tpu.pipeline_mode<synchronous>, transform_indices = @transform_7, window_bounds = array<i64: 1, 32>}, {pipeline_mode = #tpu.pipeline_mode<synchronous>, transform_indices = @transform_8, window_bounds = array<i64: 32, 32>}, {pipeline_mode = #tpu.pipeline_mode<synchronous>, transform_indices = @transform_9, window_bounds = array<i64: 1, 32>}, {transform_indices = @transform_10, window_bounds = array<i64: 1, 12, 32>}]} {
    %c0 = arith.constant 0 : index
    %c0_0 = arith.constant 0 : index
    %c0_1 = arith.constant 0 : index
    %0 = vector.load %arg1[%c0, %c0_0, %c0_1] : memref<1x12x32xf32, #tpu.memory_space<vmem>>, vector<1x12x32xf32>
    %1 = vector.shape_cast %0 : vector<1x12x32xf32> to vector<12x32xf32>
    %cst = arith.constant dense<0.000000e+00> : vector<12xf32>
    %2 = vector.multi_reduction <add>, %1, %cst [1] : vector<12x32xf32> to vector<12xf32>
    %3 = vector.shape_cast %2 : vector<12xf32> to vector<12x1xf32>
    %cst_2 = arith.constant 3.200000e+01 : f32
    %4 = vector.broadcast %cst_2 : f32 to vector<12x1xf32>
    %5 = arith.divf %3, %4 : vector<12x1xf32>
    %6 = vector.broadcast %5 : vector<12x1xf32> to vector<12x32xf32>
    %7 = arith.subf %1, %6 : vector<12x32xf32>
    %8 = arith.mulf %7, %7 : vector<12x32xf32>
    %cst_3 = arith.constant dense<0.000000e+00> : vector<12xf32>
    %9 = vector.multi_reduction <add>, %8, %cst_3 [1] : vector<12x32xf32> to vector<12xf32>
    %10 = vector.shape_cast %9 : vector<12xf32> to vector<12x1xf32>
    %cst_4 = arith.constant 3.200000e+01 : f32
    %11 = vector.broadcast %cst_4 : f32 to vector<12x1xf32>
    %12 = arith.divf %10, %11 : vector<12x1xf32>
    %13 = vector.broadcast %5 : vector<12x1xf32> to vector<12x32xf32>
    %14 = arith.subf %1, %13 : vector<12x32xf32>
    %cst_5 = arith.constant 9.99999974E-6 : f32
    %15 = vector.broadcast %cst_5 : f32 to vector<12x1xf32>
    %16 = arith.addf %12, %15 : vector<12x1xf32>
    %17 = math.rsqrt %16 : vector<12x1xf32>
    %18 = vector.broadcast %17 : vector<12x1xf32> to vector<12x32xf32>
    %19 = arith.mulf %14, %18 : vector<12x32xf32>
    %c0_6 = arith.constant 0 : index
    %c0_7 = arith.constant 0 : index
    %20 = vector.load %arg3[%c0_6, %c0_7] : memref<1x32xf32, #tpu.memory_space<vmem>>, vector<1x32xf32>
    %21 = vector.broadcast %20 : vector<1x32xf32> to vector<12x32xf32>
    %22 = arith.mulf %19, %21 : vector<12x32xf32>
    %c0_8 = arith.constant 0 : index
    %c0_9 = arith.constant 0 : index
    %23 = vector.load %arg4[%c0_8, %c0_9] : memref<1x32xf32, #tpu.memory_space<vmem>>, vector<1x32xf32>
    %24 = vector.broadcast %23 : vector<1x32xf32> to vector<12x32xf32>
    %25 = arith.addf %22, %24 : vector<12x32xf32>
    %26 = arith.truncf %25 : vector<12x32xf32> to vector<12x32xbf16>
    %27 = vector.extract_strided_slice %26 {offsets = [4, 0], sizes = [8, 32], strides = [1, 1]} : vector<12x32xbf16> to vector<8x32xbf16>
    %c0_10 = arith.constant 0 : index
    %c0_11 = arith.constant 0 : index
    %28 = vector.load %arg5[%c0_10, %c0_11] : memref<32x96xbf16, #tpu.memory_space<vmem>>, vector<32x96xbf16>
    %cst_12 = arith.constant dense<0.000000e+00> : vector<8x96xf32>
    %29 = tpu.matmul %27, %28, %cst_12 {dimension_numbers = #tpu.dot_dimension_numbers<[1], [0], [0], [1], [0, 0, 1, 1], [], []>} : vector<8x32xbf16>, vector<32x96xbf16>, vector<8x96xf32> -> vector<8x96xf32>
    %c0_13 = arith.constant 0 : index
    %c0_14 = arith.constant 0 : index
    %30 = vector.load %arg6[%c0_13, %c0_14] : memref<1x96xf32, #tpu.memory_space<vmem>>, vector<1x96xf32>
    %31 = vector.broadcast %30 : vector<1x96xf32> to vector<8x96xf32>
    %32 = arith.addf %29, %31 : vector<8x96xf32>
    %33 = vector.extract_strided_slice %32 {offsets = [0, 0], sizes = [8, 32], strides = [1, 1]} : vector<8x96xf32> to vector<8x32xf32>
    %34 = vector.extract_strided_slice %32 {offsets = [0, 32], sizes = [8, 32], strides = [1, 1]} : vector<8x96xf32> to vector<8x32xf32>
    %35 = vector.extract_strided_slice %32 {offsets = [0, 64], sizes = [8, 32], strides = [1, 1]} : vector<8x96xf32> to vector<8x32xf32>
    %36 = vector.extract_strided_slice %26 {offsets = [0, 0], sizes = [4, 32], strides = [1, 1]} : vector<12x32xbf16> to vector<4x32xbf16>
    %c0_15 = arith.constant 0 : index
    %c0_16 = arith.constant 0 : index
    %37 = vector.load %arg7[%c0_15, %c0_16] : memref<32x32xbf16, #tpu.memory_space<vmem>>, vector<32x32xbf16>
    %cst_17 = arith.constant dense<0.000000e+00> : vector<4x32xf32>
    %38 = tpu.matmul %36, %37, %cst_17 {dimension_numbers = #tpu.dot_dimension_numbers<[1], [0], [0], [1], [0, 0, 1, 1], [], []>} : vector<4x32xbf16>, vector<32x32xbf16>, vector<4x32xf32> -> vector<4x32xf32>
    %c0_18 = arith.constant 0 : index
    %c0_19 = arith.constant 0 : index
    %39 = vector.load %arg8[%c0_18, %c0_19] : memref<1x32xf32, #tpu.memory_space<vmem>>, vector<1x32xf32>
    %40 = vector.broadcast %39 : vector<1x32xf32> to vector<4x32xf32>
    %41 = arith.addf %38, %40 : vector<4x32xf32>
    %42 = tpu.concatenate %41, %33 in 0 : vector<4x32xf32>, vector<8x32xf32> -> vector<12x32xf32>
    %c0_20 = arith.constant 0 : index
    %c0_21 = arith.constant 0 : index
    %c0_22 = arith.constant 0 : index
    %43 = vector.load %arg2[%c0_20, %c0_21, %c0_22] : memref<1x4x8xf32, #tpu.memory_space<vmem>>, vector<1x4x8xf32>
    %44 = vector.shape_cast %43 : vector<1x4x8xf32> to vector<4x8xf32>
    %cst_23 = arith.constant 0.000000e+00 : f32
    %45 = vector.broadcast %cst_23 : f32 to vector<8x8xf32>
    %46 = tpu.concatenate %44, %45 in 0 : vector<4x8xf32>, vector<8x8xf32> -> vector<12x8xf32>
    %47 = arith.truncf %42 : vector<12x32xf32> to vector<12x32xbf16>
    %48 = arith.truncf %34 : vector<8x32xf32> to vector<8x32xbf16>
    %49 = arith.truncf %35 : vector<8x32xf32> to vector<8x32xbf16>
    %50 = vector.extract_strided_slice %47 {offsets = [0, 0], sizes = [12, 8], strides = [1, 1]} : vector<12x32xbf16> to vector<12x8xbf16>
    %51 = vector.extract_strided_slice %48 {offsets = [0, 0], sizes = [8, 8], strides = [1, 1]} : vector<8x32xbf16> to vector<8x8xbf16>
    %cst_24 = arith.constant dense<0.000000e+00> : vector<12x8xf32>
    %52 = tpu.matmul %50, %51, %cst_24 {dimension_numbers = #tpu.dot_dimension_numbers<[1], [1], [0], [0], [0, 0, 1, 0], [], []>} : vector<12x8xbf16>, vector<8x8xbf16>, vector<12x8xf32> -> vector<12x8xf32>
    %53 = arith.addf %52, %46 : vector<12x8xf32>
    %cst_25 = arith.constant dense<0xFF800000> : vector<12xf32>
    %54 = vector.multi_reduction <maximumf>, %53, %cst_25 [1] : vector<12x8xf32> to vector<12xf32>
    %55 = vector.shape_cast %54 : vector<12xf32> to vector<12x1xf32>
    %56 = vector.broadcast %55 : vector<12x1xf32> to vector<12x8xf32>
    %57 = arith.subf %53, %56 : vector<12x8xf32>
    %58 = math.exp %57 : vector<12x8xf32>
    %cst_26 = arith.constant dense<0.000000e+00> : vector<12xf32>
    %59 = vector.multi_reduction <add>, %58, %cst_26 [1] : vector<12x8xf32> to vector<12xf32>
    %60 = vector.shape_cast %59 : vector<12xf32> to vector<12x1xf32>
    %61 = arith.truncf %58 : vector<12x8xf32> to vector<12x8xbf16>
    %62 = vector.extract_strided_slice %49 {offsets = [0, 0], sizes = [8, 8], strides = [1, 1]} : vector<8x32xbf16> to vector<8x8xbf16>
    %cst_27 = arith.constant dense<0.000000e+00> : vector<12x8xf32>
    %63 = tpu.matmul %61, %62, %cst_27 {dimension_numbers = #tpu.dot_dimension_numbers<[1], [0], [0], [1], [0, 0, 1, 1], [], []>} : vector<12x8xbf16>, vector<8x8xbf16>, vector<12x8xf32> -> vector<12x8xf32>
    %64 = tpu.reciprocal %60 {approx = true} : vector<12x1xf32> -> vector<12x1xf32>
    %65 = vector.broadcast %64 : vector<12x1xf32> to vector<12x8xf32>
    %66 = arith.mulf %63, %65 : vector<12x8xf32>
    %67 = arith.truncf %66 : vector<12x8xf32> to vector<12x8xbf16>
    %c0_28 = arith.constant 0 : index
    %c0_29 = arith.constant 0 : index
    %68 = vector.load %arg12[%c0_28, %c0_29] : memref<12x32xbf16, #tpu.memory_space<vmem>>, vector<12x8xbf16>
    tpu.vector_store %arg12[%c0_28, %c0_29], %67 {strides = array<i32>} : memref<12x32xbf16, #tpu.memory_space<vmem>>, vector<12x8xbf16>,
    %69 = vector.extract_strided_slice %47 {offsets = [0, 8], sizes = [12, 8], strides = [1, 1]} : vector<12x32xbf16> to vector<12x8xbf16>
    %70 = vector.extract_strided_slice %48 {offsets = [0, 8], sizes = [8, 8], strides = [1, 1]} : vector<8x32xbf16> to vector<8x8xbf16>
    %cst_30 = arith.constant dense<0.000000e+00> : vector<12x8xf32>
    %71 = tpu.matmul %69, %70, %cst_30 {dimension_numbers = #tpu.dot_dimension_numbers<[1], [1], [0], [0], [0, 0, 1, 0], [], []>} : vector<12x8xbf16>, vector<8x8xbf16>, vector<12x8xf32> -> vector<12x8xf32>
    %72 = arith.addf %71, %46 : vector<12x8xf32>
    %cst_31 = arith.constant dense<0xFF800000> : vector<12xf32>
    %73 = vector.multi_reduction <maximumf>, %72, %cst_31 [1] : vector<12x8xf32> to vector<12xf32>
    %74 = vector.shape_cast %73 : vector<12xf32> to vector<12x1xf32>
    %75 = vector.broadcast %74 : vector<12x1xf32> to vector<12x8xf32>
    %76 = arith.subf %72, %75 : vector<12x8xf32>
    %77 = math.exp %76 : vector<12x8xf32>
    %cst_32 = arith.constant dense<0.000000e+00> : vector<12xf32>
    %78 = vector.multi_reduction <add>, %77, %cst_32 [1] : vector<12x8xf32> to vector<12xf32>
    %79 = vector.shape_cast %78 : vector<12xf32> to vector<12x1xf32>
    %80 = arith.truncf %77 : vector<12x8xf32> to vector<12x8xbf16>
    %81 = vector.extract_strided_slice %49 {offsets = [0, 8], sizes = [8, 8], strides = [1, 1]} : vector<8x32xbf16> to vector<8x8xbf16>
    %cst_33 = arith.constant dense<0.000000e+00> : vector<12x8xf32>
    %82 = tpu.matmul %80, %81, %cst_33 {dimension_numbers = #tpu.dot_dimension_numbers<[1], [0], [0], [1], [0, 0, 1, 1], [], []>} : vector<12x8xbf16>, vector<8x8xbf16>, vector<12x8xf32> -> vector<12x8xf32>
    %83 = tpu.reciprocal %79 {approx = true} : vector<12x1xf32> -> vector<12x1xf32>
    %84 = vector.broadcast %83 : vector<12x1xf32> to vector<12x8xf32>
    %85 = arith.mulf %82, %84 : vector<12x8xf32>
    %86 = arith.truncf %85 : vector<12x8xf32> to vector<12x8xbf16>
    %c0_34 = arith.constant 0 : index
    %c8 = arith.constant 8 : index
    %87 = vector.load %arg12[%c0_34, %c8] : memref<12x32xbf16, #tpu.memory_space<vmem>>, vector<12x8xbf16>
    tpu.vector_store %arg12[%c0_34, %c8], %86 {strides = array<i32>} : memref<12x32xbf16, #tpu.memory_space<vmem>>, vector<12x8xbf16>,
    %88 = vector.extract_strided_slice %47 {offsets = [0, 16], sizes = [12, 8], strides = [1, 1]} : vector<12x32xbf16> to vector<12x8xbf16>
    %89 = vector.extract_strided_slice %48 {offsets = [0, 16], sizes = [8, 8], strides = [1, 1]} : vector<8x32xbf16> to vector<8x8xbf16>
    %cst_35 = arith.constant dense<0.000000e+00> : vector<12x8xf32>
    %90 = tpu.matmul %88, %89, %cst_35 {dimension_numbers = #tpu.dot_dimension_numbers<[1], [1], [0], [0], [0, 0, 1, 0], [], []>} : vector<12x8xbf16>, vector<8x8xbf16>, vector<12x8xf32> -> vector<12x8xf32>
    %91 = arith.addf %90, %46 : vector<12x8xf32>
    %cst_36 = arith.constant dense<0xFF800000> : vector<12xf32>
    %92 = vector.multi_reduction <maximumf>, %91, %cst_36 [1] : vector<12x8xf32> to vector<12xf32>
    %93 = vector.shape_cast %92 : vector<12xf32> to vector<12x1xf32>
    %94 = vector.broadcast %93 : vector<12x1xf32> to vector<12x8xf32>
    %95 = arith.subf %91, %94 : vector<12x8xf32>
    %96 = math.exp %95 : vector<12x8xf32>
    %cst_37 = arith.constant dense<0.000000e+00> : vector<12xf32>
    %97 = vector.multi_reduction <add>, %96, %cst_37 [1] : vector<12x8xf32> to vector<12xf32>
    %98 = vector.shape_cast %97 : vector<12xf32> to vector<12x1xf32>
    %99 = arith.truncf %96 : vector<12x8xf32> to vector<12x8xbf16>
    %100 = vector.extract_strided_slice %49 {offsets = [0, 16], sizes = [8, 8], strides = [1, 1]} : vector<8x32xbf16> to vector<8x8xbf16>
    %cst_38 = arith.constant dense<0.000000e+00> : vector<12x8xf32>
    %101 = tpu.matmul %99, %100, %cst_38 {dimension_numbers = #tpu.dot_dimension_numbers<[1], [0], [0], [1], [0, 0, 1, 1], [], []>} : vector<12x8xbf16>, vector<8x8xbf16>, vector<12x8xf32> -> vector<12x8xf32>
    %102 = tpu.reciprocal %98 {approx = true} : vector<12x1xf32> -> vector<12x1xf32>
    %103 = vector.broadcast %102 : vector<12x1xf32> to vector<12x8xf32>
    %104 = arith.mulf %101, %103 : vector<12x8xf32>
    %105 = arith.truncf %104 : vector<12x8xf32> to vector<12x8xbf16>
    %c0_39 = arith.constant 0 : index
    %c16 = arith.constant 16 : index
    %106 = vector.load %arg12[%c0_39, %c16] : memref<12x32xbf16, #tpu.memory_space<vmem>>, vector<12x8xbf16>
    tpu.vector_store %arg12[%c0_39, %c16], %105 {strides = array<i32>} : memref<12x32xbf16, #tpu.memory_space<vmem>>, vector<12x8xbf16>,
    %107 = vector.extract_strided_slice %47 {offsets = [0, 24], sizes = [12, 8], strides = [1, 1]} : vector<12x32xbf16> to vector<12x8xbf16>
    %108 = vector.extract_strided_slice %48 {offsets = [0, 24], sizes = [8, 8], strides = [1, 1]} : vector<8x32xbf16> to vector<8x8xbf16>
    %cst_40 = arith.constant dense<0.000000e+00> : vector<12x8xf32>
    %109 = tpu.matmul %107, %108, %cst_40 {dimension_numbers = #tpu.dot_dimension_numbers<[1], [1], [0], [0], [0, 0, 1, 0], [], []>} : vector<12x8xbf16>, vector<8x8xbf16>, vector<12x8xf32> -> vector<12x8xf32>
    %110 = arith.addf %109, %46 : vector<12x8xf32>
    %cst_41 = arith.constant dense<0xFF800000> : vector<12xf32>
    %111 = vector.multi_reduction <maximumf>, %110, %cst_41 [1] : vector<12x8xf32> to vector<12xf32>
    %112 = vector.shape_cast %111 : vector<12xf32> to vector<12x1xf32>
    %113 = vector.broadcast %112 : vector<12x1xf32> to vector<12x8xf32>
    %114 = arith.subf %110, %113 : vector<12x8xf32>
    %115 = math.exp %114 : vector<12x8xf32>
    %cst_42 = arith.constant dense<0.000000e+00> : vector<12xf32>
    %116 = vector.multi_reduction <add>, %115, %cst_42 [1] : vector<12x8xf32> to vector<12xf32>
    %117 = vector.shape_cast %116 : vector<12xf32> to vector<12x1xf32>
    %118 = arith.truncf %115 : vector<12x8xf32> to vector<12x8xbf16>
    %119 = vector.extract_strided_slice %49 {offsets = [0, 24], sizes = [8, 8], strides = [1, 1]} : vector<8x32xbf16> to vector<8x8xbf16>
    %cst_43 = arith.constant dense<0.000000e+00> : vector<12x8xf32>
    %120 = tpu.matmul %118, %119, %cst_43 {dimension_numbers = #tpu.dot_dimension_numbers<[1], [0], [0], [1], [0, 0, 1, 1], [], []>} : vector<12x8xbf16>, vector<8x8xbf16>, vector<12x8xf32> -> vector<12x8xf32>
    %121 = tpu.reciprocal %117 {approx = true} : vector<12x1xf32> -> vector<12x1xf32>
    %122 = vector.broadcast %121 : vector<12x1xf32> to vector<12x8xf32>
    %123 = arith.mulf %120, %122 : vector<12x8xf32>
    %124 = arith.truncf %123 : vector<12x8xf32> to vector<12x8xbf16>
    %c0_44 = arith.constant 0 : index
    %c24 = arith.constant 24 : index
    %125 = vector.load %arg12[%c0_44, %c24] : memref<12x32xbf16, #tpu.memory_space<vmem>>, vector<12x8xbf16>
    tpu.vector_store %arg12[%c0_44, %c24], %124 {strides = array<i32>} : memref<12x32xbf16, #tpu.memory_space<vmem>>, vector<12x8xbf16>,
    %c0_45 = arith.constant 0 : index
    %c0_46 = arith.constant 0 : index
    %126 = vector.load %arg12[%c0_45, %c0_46] : memref<12x32xbf16, #tpu.memory_space<vmem>>, vector<12x32xbf16>
    %c0_47 = arith.constant 0 : index
    %c0_48 = arith.constant 0 : index
    %127 = vector.load %arg9[%c0_47, %c0_48] : memref<32x32xbf16, #tpu.memory_space<vmem>>, vector<32x32xbf16>
    %cst_49 = arith.constant dense<0.000000e+00> : vector<12x32xf32>
    %128 = tpu.matmul %126, %127, %cst_49 {dimension_numbers = #tpu.dot_dimension_numbers<[1], [0], [0], [1], [0, 0, 1, 1], [], []>} : vector<12x32xbf16>, vector<32x32xbf16>, vector<12x32xf32> -> vector<12x32xf32>
    %c0_50 = arith.constant 0 : index
    %c0_51 = arith.constant 0 : index
    %129 = vector.load %arg10[%c0_50, %c0_51] : memref<1x32xf32, #tpu.memory_space<vmem>>, vector<1x32xf32>
    %130 = vector.broadcast %129 : vector<1x32xf32> to vector<12x32xf32>
    %131 = arith.addf %128, %130 : vector<12x32xf32>
    %132 = arith.addf %1, %131 : vector<12x32xf32>
    %c0_52 = arith.constant 0 : index
    %c0_53 = arith.constant 0 : index
    %c0_54 = arith.constant 0 : index
    %133 = vector.load %arg11[%c0_52, %c0_53, %c0_54] : memref<1x12x32xf32, #tpu.memory_space<vmem>>, vector<1x12x32xf32>
    %134 = vector.shape_cast %133 : vector<1x12x32xf32> to vector<12x32xf32>
    %135 = vector.shape_cast %132 : vector<12x32xf32> to vector<1x12x32xf32>
    tpu.vector_store %arg11[%c0_52, %c0_53, %c0_54], %135 {strides = array<i32>} : memref<1x12x32xf32, #tpu.memory_space<vmem>>, vector<1x12x32xf32>,
    return
  }
  func.func @transform_0(%arg0: i32) -> (i32, i32, i32) {
    %c0_i32 = arith.constant 0 : i32
    %c0_i32_0 = arith.constant 0 : i32
    %c0_i32_1 = arith.constant 0 : i32
    return %arg0, %c0_i32, %c0_i32_0 : i32, i32, i32
  }
  func.func @transform_1(%arg0: i32) -> (i32, i32, i32) {
    %c0_i32 = arith.constant 0 : i32
    %c0_i32_0 = arith.constant 0 : i32
    %c0_i32_1 = arith.constant 0 : i32
    return %arg0, %c0_i32, %c0_i32_0 : i32, i32, i32
  }
  func.func @transform_2(%arg0: i32) -> (i32, i32) {
    %c0_i32 = arith.constant 0 : i32
    %c0_i32_0 = arith.constant 0 : i32
    %c0_i32_1 = arith.constant 0 : i32
    return %c0_i32, %c0_i32_0 : i32, i32
  }
  func.func @transform_3(%arg0: i32) -> (i32, i32) {
    %c0_i32 = arith.constant 0 : i32
    %c0_i32_0 = arith.constant 0 : i32
    %c0_i32_1 = arith.constant 0 : i32
    return %c0_i32, %c0_i32_0 : i32, i32
  }
  func.func @transform_4(%arg0: i32) -> (i32, i32) {
    %c0_i32 = arith.constant 0 : i32
    %c0_i32_0 = arith.constant 0 : i32
    %c0_i32_1 = arith.constant 0 : i32
    return %c0_i32, %c0_i32_0 : i32, i32
  }
  func.func @transform_5(%arg0: i32) -> (i32, i32) {
    %c0_i32 = arith.constant 0 : i32
    %c0_i32_0 = arith.constant 0 : i32
    %c0_i32_1 = arith.constant 0 : i32
    return %c0_i32, %c0_i32_0 : i32, i32
  }
  func.func @transform_6(%arg0: i32) -> (i32, i32) {
    %c0_i32 = arith.constant 0 : i32
    %c0_i32_0 = arith.constant 0 : i32
    %c0_i32_1 = arith.constant 0 : i32
    return %c0_i32, %c0_i32_0 : i32, i32
  }
  func.func @transform_7(%arg0: i32) -> (i32, i32) {
    %c0_i32 = arith.constant 0 : i32
    %c0_i32_0 = arith.constant 0 : i32
    %c0_i32_1 = arith.constant 0 : i32
    return %c0_i32, %c0_i32_0 : i32, i32
  }
  func.func @transform_8(%arg0: i32) -> (i32, i32) {
    %c0_i32 = arith.constant 0 : i32
    %c0_i32_0 = arith.constant 0 : i32
    %c0_i32_1 = arith.constant 0 : i32
    return %c0_i32, %c0_i32_0 : i32, i32
  }
  func.func @transform_9(%arg0: i32) -> (i32, i32) {
    %c0_i32 = arith.constant 0 : i32
    %c0_i32_0 = arith.constant 0 : i32
    %c0_i32_1 = arith.constant 0 : i32
    return %c0_i32, %c0_i32_0 : i32, i32
  }
  func.func @transform_10(%arg0: i32) -> (i32, i32, i32) {
    %c0_i32 = arith.constant 0 : i32
    %c0_i32_0 = arith.constant 0 : i32
    %c0_i32_1 = arith.constant 0 : i32
    return %arg0, %c0_i32, %c0_i32_0 : i32, i32, i32
  }
}

module attributes {stable_mosaic.version = 11 : i64} {
  func.func @_mlp_block_kernel(%arg0: i32, %arg1: memref<24x32xf32, #tpu.memory_space<vmem>>, %arg2: memref<1x32xf32, #tpu.memory_space<vmem>>, %arg3: memref<1x32xf32, #tpu.memory_space<vmem>>, %arg4: memref<32x128xbf16, #tpu.memory_space<vmem>>, %arg5: memref<1x128xf32, #tpu.memory_space<vmem>>, %arg6: memref<128x32xbf16, #tpu.memory_space<vmem>>, %arg7: memref<1x32xf32, #tpu.memory_space<vmem>>, %arg8: memref<24x32xf32, #tpu.memory_space<vmem>>) attributes {dimension_semantics = [#tpu.dimension_semantics<parallel>], iteration_bounds = array<i64: 1>, scalar_prefetch = 0 : i64, scratch_operands = 0 : i64, tpu.core_type = #tpu.core_type<tc>, window_params = [{transform_indices = @transform_0, window_bounds = array<i64: 24, 32>}, {pipeline_mode = #tpu.pipeline_mode<synchronous>, transform_indices = @transform_1, window_bounds = array<i64: 1, 32>}, {pipeline_mode = #tpu.pipeline_mode<synchronous>, transform_indices = @transform_2, window_bounds = array<i64: 1, 32>}, {pipeline_mode = #tpu.pipeline_mode<synchronous>, transform_indices = @transform_3, window_bounds = array<i64: 32, 128>}, {pipeline_mode = #tpu.pipeline_mode<synchronous>, transform_indices = @transform_4, window_bounds = array<i64: 1, 128>}, {pipeline_mode = #tpu.pipeline_mode<synchronous>, transform_indices = @transform_5, window_bounds = array<i64: 128, 32>}, {pipeline_mode = #tpu.pipeline_mode<synchronous>, transform_indices = @transform_6, window_bounds = array<i64: 1, 32>}, {transform_indices = @transform_7, window_bounds = array<i64: 24, 32>}]} {
    %c0 = arith.constant 0 : index
    %c0_0 = arith.constant 0 : index
    %0 = vector.load %arg1[%c0, %c0_0] : memref<24x32xf32, #tpu.memory_space<vmem>>, vector<24x32xf32>
    %cst = arith.constant dense<0.000000e+00> : vector<24xf32>
    %1 = vector.multi_reduction <add>, %0, %cst [1] : vector<24x32xf32> to vector<24xf32>
    %2 = vector.shape_cast %1 : vector<24xf32> to vector<24x1xf32>
    %cst_1 = arith.constant 3.200000e+01 : f32
    %3 = vector.broadcast %cst_1 : f32 to vector<24x1xf32>
    %4 = arith.divf %2, %3 : vector<24x1xf32>
    %5 = vector.broadcast %4 : vector<24x1xf32> to vector<24x32xf32>
    %6 = arith.subf %0, %5 : vector<24x32xf32>
    %7 = arith.mulf %6, %6 : vector<24x32xf32>
    %cst_2 = arith.constant dense<0.000000e+00> : vector<24xf32>
    %8 = vector.multi_reduction <add>, %7, %cst_2 [1] : vector<24x32xf32> to vector<24xf32>
    %9 = vector.shape_cast %8 : vector<24xf32> to vector<24x1xf32>
    %cst_3 = arith.constant 3.200000e+01 : f32
    %10 = vector.broadcast %cst_3 : f32 to vector<24x1xf32>
    %11 = arith.divf %9, %10 : vector<24x1xf32>
    %12 = vector.broadcast %4 : vector<24x1xf32> to vector<24x32xf32>
    %13 = arith.subf %0, %12 : vector<24x32xf32>
    %cst_4 = arith.constant 9.99999974E-6 : f32
    %14 = vector.broadcast %cst_4 : f32 to vector<24x1xf32>
    %15 = arith.addf %11, %14 : vector<24x1xf32>
    %16 = math.rsqrt %15 : vector<24x1xf32>
    %17 = vector.broadcast %16 : vector<24x1xf32> to vector<24x32xf32>
    %18 = arith.mulf %13, %17 : vector<24x32xf32>
    %c0_5 = arith.constant 0 : index
    %c0_6 = arith.constant 0 : index
    %19 = vector.load %arg2[%c0_5, %c0_6] : memref<1x32xf32, #tpu.memory_space<vmem>>, vector<1x32xf32>
    %20 = vector.broadcast %19 : vector<1x32xf32> to vector<24x32xf32>
    %21 = arith.mulf %18, %20 : vector<24x32xf32>
    %c0_7 = arith.constant 0 : index
    %c0_8 = arith.constant 0 : index
    %22 = vector.load %arg3[%c0_7, %c0_8] : memref<1x32xf32, #tpu.memory_space<vmem>>, vector<1x32xf32>
    %23 = vector.broadcast %22 : vector<1x32xf32> to vector<24x32xf32>
    %24 = arith.addf %21, %23 : vector<24x32xf32>
    %25 = arith.truncf %24 : vector<24x32xf32> to vector<24x32xbf16>
    %c0_9 = arith.constant 0 : index
    %c0_10 = arith.constant 0 : index
    %26 = vector.load %arg4[%c0_9, %c0_10] : memref<32x128xbf16, #tpu.memory_space<vmem>>, vector<32x128xbf16>
    %cst_11 = arith.constant dense<0.000000e+00> : vector<24x128xf32>
    %27 = tpu.matmul %25, %26, %cst_11 {dimension_numbers = #tpu.dot_dimension_numbers<[1], [0], [0], [1], [0, 0, 1, 1], [], []>} : vector<24x32xbf16>, vector<32x128xbf16>, vector<24x128xf32> -> vector<24x128xf32>
    %c0_12 = arith.constant 0 : index
    %c0_13 = arith.constant 0 : index
    %28 = vector.load %arg5[%c0_12, %c0_13] : memref<1x128xf32, #tpu.memory_space<vmem>>, vector<1x128xf32>
    %29 = vector.broadcast %28 : vector<1x128xf32> to vector<24x128xf32>
    %30 = arith.addf %27, %29 : vector<24x128xf32>
    %31 = arith.truncf %30 : vector<24x128xf32> to vector<24x128xbf16>
    %cst_14 = arith.constant -1.703130e+00 : bf16
    %32 = vector.broadcast %cst_14 : bf16 to vector<24x128xbf16>
    %33 = arith.mulf %32, %31 : vector<24x128xbf16>
    %34 = math.exp %33 : vector<24x128xbf16>
    %cst_15 = arith.constant 1.000000e+00 : bf16
    %35 = vector.broadcast %cst_15 : bf16 to vector<24x128xbf16>
    %36 = arith.addf %35, %34 : vector<24x128xbf16>
    %cst_16 = arith.constant 1.000000e+00 : bf16
    %37 = vector.broadcast %cst_16 : bf16 to vector<24x128xbf16>
    %38 = arith.divf %37, %36 : vector<24x128xbf16>
    %39 = arith.mulf %31, %38 : vector<24x128xbf16>
    %c0_17 = arith.constant 0 : index
    %c0_18 = arith.constant 0 : index
    %40 = vector.load %arg6[%c0_17, %c0_18] : memref<128x32xbf16, #tpu.memory_space<vmem>>, vector<128x32xbf16>
    %cst_19 = arith.constant dense<0.000000e+00> : vector<24x32xf32>
    %41 = tpu.matmul %39, %40, %cst_19 {dimension_numbers = #tpu.dot_dimension_numbers<[1], [0], [0], [1], [0, 0, 1, 1], [], []>} : vector<24x128xbf16>, vector<128x32xbf16>, vector<24x32xf32> -> vector<24x32xf32>
    %42 = arith.addf %0, %41 : vector<24x32xf32>
    %c0_20 = arith.constant 0 : index
    %c0_21 = arith.constant 0 : index
    %43 = vector.load %arg7[%c0_20, %c0_21] : memref<1x32xf32, #tpu.memory_space<vmem>>, vector<1x32xf32>
    %44 = vector.broadcast %43 : vector<1x32xf32> to vector<24x32xf32>
    %45 = arith.addf %42, %44 : vector<24x32xf32>
    %c0_22 = arith.constant 0 : index
    %c0_23 = arith.constant 0 : index
    %46 = vector.load %arg8[%c0_22, %c0_23] : memref<24x32xf32, #tpu.memory_space<vmem>>, vector<24x32xf32>
    tpu.vector_store %arg8[%c0_22, %c0_23], %45 {strides = array<i32>} : memref<24x32xf32, #tpu.memory_space<vmem>>, vector<24x32xf32>,
    return
  }
  func.func @transform_0(%arg0: i32) -> (i32, i32) {
    %c0_i32 = arith.constant 0 : i32
    %c0_i32_0 = arith.constant 0 : i32
    return %arg0, %c0_i32 : i32, i32
  }
  func.func @transform_1(%arg0: i32) -> (i32, i32) {
    %c0_i32 = arith.constant 0 : i32
    %c0_i32_0 = arith.constant 0 : i32
    %c0_i32_1 = arith.constant 0 : i32
    return %c0_i32, %c0_i32_0 : i32, i32
  }
  func.func @transform_2(%arg0: i32) -> (i32, i32) {
    %c0_i32 = arith.constant 0 : i32
    %c0_i32_0 = arith.constant 0 : i32
    %c0_i32_1 = arith.constant 0 : i32
    return %c0_i32, %c0_i32_0 : i32, i32
  }
  func.func @transform_3(%arg0: i32) -> (i32, i32) {
    %c0_i32 = arith.constant 0 : i32
    %c0_i32_0 = arith.constant 0 : i32
    %c0_i32_1 = arith.constant 0 : i32
    return %c0_i32, %c0_i32_0 : i32, i32
  }
  func.func @transform_4(%arg0: i32) -> (i32, i32) {
    %c0_i32 = arith.constant 0 : i32
    %c0_i32_0 = arith.constant 0 : i32
    %c0_i32_1 = arith.constant 0 : i32
    return %c0_i32, %c0_i32_0 : i32, i32
  }
  func.func @transform_5(%arg0: i32) -> (i32, i32) {
    %c0_i32 = arith.constant 0 : i32
    %c0_i32_0 = arith.constant 0 : i32
    %c0_i32_1 = arith.constant 0 : i32
    return %c0_i32, %c0_i32_0 : i32, i32
  }
  func.func @transform_6(%arg0: i32) -> (i32, i32) {
    %c0_i32 = arith.constant 0 : i32
    %c0_i32_0 = arith.constant 0 : i32
    %c0_i32_1 = arith.constant 0 : i32
    return %c0_i32, %c0_i32_0 : i32, i32
  }
  func.func @transform_7(%arg0: i32) -> (i32, i32) {
    %c0_i32 = arith.constant 0 : i32
    %c0_i32_0 = arith.constant 0 : i32
    return %arg0, %c0_i32 : i32, i32
  }
}

</mosaic_0001>

<llo_original>
// kernel: _lambda_.5
$region0: #{_lambda_.5}
  #allocation0 [shape = 'u32[]', space=smem, size = 0x4, offset = 0x4, fixed_abs, tag = 'smem constant byte address 0x4 - core index']
  #allocation1 [shape = 'u32[144,128]{1,0:T(1,128)}', space=vmem, size = 0x12000, scoped, tag = 'internal scratch']
  %s0 = inlined_call_operand.vmem [shape: f32[24,32], index: 0, kind: input, shape index: {}]
  %s1 = inlined_call_operand.vmem [shape: f32[1,32], index: 1, kind: input, shape index: {}]
  %s2 = inlined_call_operand.vmem [shape: f32[1,32], index: 2, kind: input, shape index: {}]
  %s3 = inlined_call_operand.vmem [shape: bf16[32,128], index: 3, kind: input, shape index: {}]
  %s4 = inlined_call_operand.vmem [shape: f32[1,128], index: 4, kind: input, shape index: {}]
  %s5 = inlined_call_operand.vmem [shape: bf16[128,32], index: 5, kind: input, shape index: {}]
  %s6 = inlined_call_operand.vmem [shape: f32[1,32], index: 6, kind: input, shape index: {}]
  %s7 = inlined_call_operand.vmem [shape: f32[24,32], index: 7, kind: output, shape index: {}]
  %s8 = sld [smem:[#allocation0]]
  $region38: #{_lambda_.5} parent=0
    _
  %s10 = ssub.s32 1, %s8
  %s11 = scalar_select 0, %s10, %s8
  // Predicated region
  $region2: #{_lambda_.5} parent=0 // pred_check
    _
  $region3: #{_lambda_.5} parent=0 // pred_check_branch
    %13 = sbr.rel (0) target = $region5
  $region4: #{_lambda_.5} parent=0 // pred_region
    _
  $region5: #{_lambda_.5} parent=0 // pred_fallthru
    _
  // Predicated region
  $region6: #{_lambda_.5} parent=0 // pred_check
    _
  $region7: #{_lambda_.5} parent=0 // pred_check_branch
    %15 = sbr.rel (0) target = $region9
  $region8: #{_lambda_.5} parent=0 // pred_region
    _
  $region9: #{_lambda_.5} parent=0 // pred_fallthru
    _
  // Predicated region
  $region10: #{_lambda_.5} parent=0 // pred_check
    _
  $region11: #{_lambda_.5} parent=0 // pred_check_branch
    %17 = sbr.rel (0) target = $region13
  $region12: #{_lambda_.5} parent=0 // pred_region
    _
  $region13: #{_lambda_.5} parent=0 // pred_fallthru
    _
  // Predicated region
  $region14: #{_lambda_.5} parent=0 // pred_check
    _
  $region15: #{_lambda_.5} parent=0 // pred_check_branch
    %19 = sbr.rel (0) target = $region17
  $region16: #{_lambda_.5} parent=0 // pred_region
    _
  $region17: #{_lambda_.5} parent=0 // pred_fallthru
    _
  // Predicated region
  $region18: #{_lambda_.5} parent=0 // pred_check
    _
  $region19: #{_lambda_.5} parent=0 // pred_check_branch
    %21 = sbr.rel (0) target = $region21
  $region20: #{_lambda_.5} parent=0 // pred_region
    _
  $region21: #{_lambda_.5} parent=0 // pred_fallthru
    _
  // Predicated region
  $region22: #{_lambda_.5} parent=0 // pred_check
    _
  $region23: #{_lambda_.5} parent=0 // pred_check_branch
    %23 = sbr.rel (0) target = $region25
  $region24: #{_lambda_.5} parent=0 // pred_region
    _
  $region25: #{_lambda_.5} parent=0 // pred_fallthru
    _
  // Predicated region
  $region26: #{_lambda_.5} parent=0 // pred_check
    _
  $region27: #{_lambda_.5} parent=0 // pred_check_branch
    %25 = sbr.rel (0) target = $region29
  $region28: #{_lambda_.5} parent=0 // pred_region
    _
  $region29: #{_lambda_.5} parent=0 // pred_fallthru
    _
  %v29 = vld [vmem:[%s0] sm:$0xff]
  %v30 = vld [vmem:[%s0 + $0x8] sm:$0xff]
  %v31 = vld [vmem:[%s0 + $0x10] sm:$0xff]
  %vm32 = vcmask 261120
  %v33 = vsel %vm32, %v29, 0.0
  %34 = vadd.xlane.f32.xlu0 %v33
  %v35 = vpop.xlane.xlu0 %34
  %v36 = vsel %vm32, %v30, 0.0
  %37 = vadd.xlane.f32.xlu0 %v36
  %v38 = vpop.xlane.xlu0 %37
  %v39 = vsel %vm32, %v31, 0.0
  %40 = vadd.xlane.f32.xlu0 %v39
  %v41 = vpop.xlane.xlu0 %40
  %v42 = vrcp.pop 32.0
  %v43 = vmul.f32 %v35, %v42
  %v44 = vmul.f32 %v38, %v42
  %v45 = vmul.f32 %v41, %v42
  %v46 = vsub.f32 %v29, %v43
  %v47 = vsub.f32 %v30, %v44
  %v48 = vsub.f32 %v31, %v45
  %v49 = vmul.f32 %v46, %v46
  %v50 = vmul.f32 %v47, %v47
  %v51 = vmul.f32 %v48, %v48
  %v52 = vsel %vm32, %v49, 0.0
  %53 = vadd.xlane.f32.xlu0 %v52
  %v54 = vpop.xlane.xlu0 %53
  %v55 = vsel %vm32, %v50, 0.0
  %56 = vadd.xlane.f32.xlu0 %v55
  %v57 = vpop.xlane.xlu0 %56
  %v58 = vsel %vm32, %v51, 0.0
  %59 = vadd.xlane.f32.xlu0 %v58
  %v60 = vpop.xlane.xlu0 %59
  %v61 = vmul.f32 %v54, %v42
  %v62 = vmul.f32 %v57, %v42
  %v63 = vmul.f32 %v60, %v42
  %v64 = vadd.f32 %v61, 1e-05
  %v65 = vadd.f32 %v62, 1e-05
  %v66 = vadd.f32 %v63, 1e-05
  %v67 = vrsqrt.pop %v64
  %v68 = vrsqrt.pop %v65
  %v69 = vrsqrt.pop %v66
  %v70 = vmul.f32 %v46, %v67
  %v71 = vmul.f32 %v47, %v68
  %v72 = vmul.f32 %v48, %v69
  %v73 = vld [vmem:[%s1] sm:$0x1]
  %v75 = vlaneseq
  %v76 = vshrl.u32 %v75, 7
  %v77 = vsub.s32 0, %v76
  %v78 = vrot.slane %v73, %v77
  %v80 = vmul.f32 %v70, %v78
  %v81 = vmul.f32 %v71, %v78
  %v82 = vmul.f32 %v72, %v78
  %v83 = vld [vmem:[%s2] sm:$0x1]
  %v85 = vlaneseq
  %v86 = vshrl.u32 %v85, 7
  %v87 = vsub.s32 0, %v86
  %v88 = vrot.slane %v83, %v87
  %v90 = vadd.f32 %v80, %v88
  %v91 = vadd.f32 %v81, %v88
  %v92 = vadd.f32 %v82, %v88
  %v93 = vpack.c.bf16 %v91, %v90
  %v94 = vpack.c.bf16 %v92, %v92
  %v95 = vld [vmem:[%s3] sm:$0xf]
  %v96 = vld [vmem:[%s3 + $0x4] sm:$0xf]
  %v97 = vld [vmem:[%s3 + $0x8] sm:$0xf]
  %v98 = vld [vmem:[%s3 + $0xc] sm:$0xf]
  %v99 = vld [vmem:[%s4] sm:$0x1]
  %v101 = vlaneseq
  %v102 = vshrl.u32 %v101, 7
  %v103 = vsub.s32 0, %v102
  %v104 = vrot.slane %v99, %v103
  %v110 = vunpack.c.l.b16 %v95
  %v111 = vunpack.c.l.b16 %v96
  %v112 = vunpack.c.l.b16 %v97
  %v113 = vunpack.c.l.b16 %v98
  %v114 = vpack.c.b16 %v111, %v110
  %v115 = vpack.c.b16 %v113, %v112
  %v119 = vsel %vm32, %v93, 0
  %v122 = vsel %vm32, %v94, 0
  %124 = vmatprep.subr.bf16.mxu0 0
  %125 = vmatpush1.bf16.msra.mxu0 %v114
  %126 = vmatprep.subr.bf16.mxu0 0
  %127 = vmatpush1.bf16.msra.mxu0 %v115
  %128 = vmatprep.subr.bf16.mxu0 0
  %129 = vmatpush1.bf16.msra.mxu0 0
  %130 = vmatprep.subr.bf16.mxu0 0
  %131 = vmatpush1.bf16.msra.mxu0 0
  %132 = vmatprep.subr.bf16.mxu0 0
  %133 = vmatpush1.bf16.msra.mxu0 0
  %134 = vmatprep.subr.bf16.mxu0 0
  %135 = vmatpush1.bf16.msra.mxu0 0
  %136 = vmatprep.subr.bf16.mxu0 0
  %137 = vmatpush1.bf16.msra.mxu0 0
  %138 = vmatprep.subr.bf16.mxu0 0
  %139 = vmatpush1.bf16.msra.mxu0 0
  %140 = vmatprep.subr.bf16.mxu0 0
  %141 = vmatpush1.bf16.msra.mxu0 0
  %142 = vmatprep.subr.bf16.mxu0 0
  %143 = vmatpush1.bf16.msra.mxu0 0
  %144 = vmatprep.subr.bf16.mxu0 0
  %145 = vmatpush1.bf16.msra.mxu0 0
  %146 = vmatprep.subr.bf16.mxu0 0
  %147 = vmatpush1.bf16.msra.mxu0 0
  %148 = vmatprep.subr.bf16.mxu0 0
  %149 = vmatpush1.bf16.msra.mxu0 0
  %150 = vmatprep.subr.bf16.mxu0 0
  %151 = vmatpush1.bf16.msra.mxu0 0
  %152 = vmatprep.subr.bf16.mxu0 0
  %153 = vmatpush1.bf16.msra.mxu0 0
  %154 = vmatprep.subr.bf16.mxu0 0
  %155 = vmatpush1.bf16.msra.mxu0 0
  %156 = vmatprep.mubr.bf16.mxu0 0
  %157 = vmatmul.mubr.bf16.gmra.mrb[0].mxu0 %v119
  %v158 = vpop.f32.mrb[0].mxu0
  %v159 = vadd.f32 %v104, %v158
  %v160 = vpop.f32.mrb[0].mxu0
  %v161 = vpop.f32.mrb[0].mxu0
  %v162 = vadd.f32 %v104, %v161
  %v163 = vpop.f32.mrb[0].mxu0
  %164 = vmatprep.mubr.bf16.mxu0 0
  %165 = vmatmul.mubr.bf16.gmra.mrb[0].mxu0 %v122
  %v166 = vpop.f32.mrb[0].mxu0
  %v167 = vadd.f32 %v104, %v166
  %v168 = vpop.f32.mrb[0].mxu0
  %v169 = vpop.f32.mrb[0].mxu0
  %v170 = vpop.f32.mrb[0].mxu0
  %171 = vdwg.mxu0
  %v172 = vpack.c.bf16 %v162, %v159
  %v173 = vpack.c.bf16 %v167, %v167
  %v174 = vmul.bf16 %v172, 3218784218
  %v175 = vmul.bf16 %v173, 3218784218
  %v177 = vmul.bf16 %v174, 1069105081
  %v178 = vpow.bf16.pop %v177
  %v180 = vmul.bf16 %v175, 1069105081
  %v181 = vpow.bf16.pop %v180
  %v182 = vadd.bf16 %v178, 1065369472
  %v183 = vadd.bf16 %v181, 1065369472
  %v184 = vrcp.bf16.pop %v182
  %v185 = vmul.bf16 1065369472, %v184
  %v186 = vrcp.bf16.pop %v183
  %v187 = vmul.bf16 1065369472, %v186
  %v188 = vmul.bf16 %v172, %v185
  %v189 = vmul.bf16 %v173, %v187
  %v190 = vld [vmem:[%s5] sm:$0xf]
  %v191 = vld [vmem:[%s5 + $0x4] sm:$0xf]
  %v192 = vld [vmem:[%s5 + $0x8] sm:$0xf]
  %v193 = vld [vmem:[%s5 + $0xc] sm:$0xf]
  %v194 = vld [vmem:[%s5 + $0x10] sm:$0xf]
  %v195 = vld [vmem:[%s5 + $0x14] sm:$0xf]
  %v196 = vld [vmem:[%s5 + $0x18] sm:$0xf]
  %v197 = vld [vmem:[%s5 + $0x1c] sm:$0xf]
  %v198 = vld [vmem:[%s5 + $0x20] sm:$0xf]
  %v199 = vld [vmem:[%s5 + $0x24] sm:$0xf]
  %v200 = vld [vmem:[%s5 + $0x28] sm:$0xf]
  %v201 = vld [vmem:[%s5 + $0x2c] sm:$0xf]
  %v202 = vld [vmem:[%s5 + $0x30] sm:$0xf]
  %v203 = vld [vmem:[%s5 + $0x34] sm:$0xf]
  %v204 = vld [vmem:[%s5 + $0x38] sm:$0xf]
  %v205 = vld [vmem:[%s5 + $0x3c] sm:$0xf]
  %v222 = vunpack.c.l.b16 %v190
  %v223 = vunpack.c.l.b16 %v191
  %v224 = vunpack.c.l.b16 %v192
  %v225 = vunpack.c.l.b16 %v193
  %v226 = vunpack.c.l.b16 %v194
  %v227 = vunpack.c.l.b16 %v195
  %v228 = vunpack.c.l.b16 %v196
  %v229 = vunpack.c.l.b16 %v197
  %v230 = vunpack.c.l.b16 %v198
  %v231 = vunpack.c.l.b16 %v199
  %v232 = vunpack.c.l.b16 %v200
  %v233 = vunpack.c.l.b16 %v201
  %v234 = vunpack.c.l.b16 %v202
  %v235 = vunpack.c.l.b16 %v203
  %v236 = vunpack.c.l.b16 %v204
  %v237 = vunpack.c.l.b16 %v205
  %v238 = vpack.c.b16 %v223, %v222
  %v239 = vpack.c.b16 %v225, %v224
  %v240 = vpack.c.b16 %v227, %v226
  %v241 = vpack.c.b16 %v229, %v228
  %v242 = vpack.c.b16 %v231, %v230
  %v243 = vpack.c.b16 %v233, %v232
  %v244 = vpack.c.b16 %v235, %v234
  %v245 = vpack.c.b16 %v237, %v236
  %254 = vmatprep.subr.bf16.mxu0 0
  %255 = vmatpush1.bf16.msra.mxu0 %v238
  %256 = vmatprep.subr.bf16.mxu0 0
  %257 = vmatpush1.bf16.msra.mxu0 %v239
  %258 = vmatprep.subr.bf16.mxu0 0
  %259 = vmatpush1.bf16.msra.mxu0 %v240
  %260 = vmatprep.subr.bf16.mxu0 0
  %261 = vmatpush1.bf16.msra.mxu0 %v241
  %262 = vmatprep.subr.bf16.mxu0 0
  %263 = vmatpush1.bf16.msra.mxu0 %v242
  %264 = vmatprep.subr.bf16.mxu0 0
  %265 = vmatpush1.bf16.msra.mxu0 %v243
  %266 = vmatprep.subr.bf16.mxu0 0
  %267 = vmatpush1.bf16.msra.mxu0 %v244
  %268 = vmatprep.subr.bf16.mxu0 0
  %269 = vmatpush1.bf16.msra.mxu0 %v245
  %270 = vmatprep.subr.bf16.mxu0 0
  %271 = vmatpush1.bf16.msra.mxu0 0
  %272 = vmatprep.subr.bf16.mxu0 0
  %273 = vmatpush1.bf16.msra.mxu0 0
  %274 = vmatprep.subr.bf16.mxu0 0
  %275 = vmatpush1.bf16.msra.mxu0 0
  %276 = vmatprep.subr.bf16.mxu0 0
  %277 = vmatpush1.bf16.msra.mxu0 0
  %278 = vmatprep.subr.bf16.mxu0 0
  %279 = vmatpush1.bf16.msra.mxu0 0
  %280 = vmatprep.subr.bf16.mxu0 0
  %281 = vmatpush1.bf16.msra.mxu0 0
  %282 = vmatprep.subr.bf16.mxu0 0
  %283 = vmatpush1.bf16.msra.mxu0 0
  %284 = vmatprep.subr.bf16.mxu0 0
  %285 = vmatpush1.bf16.msra.mxu0 0
  %286 = vmatprep.mubr.bf16.mxu0 0
  %287 = vmatmul.mubr.bf16.gmra.mrb[0].mxu0 %v188
  %v288 = vpop.f32.mrb[0].mxu0
  %v289 = vadd.f32 0.0, %v288
  %v290 = vpop.f32.mrb[0].mxu0
  %v291 = vpop.f32.mrb[0].mxu0
  %v292 = vadd.f32 0.0, %v291
  %v293 = vpop.f32.mrb[0].mxu0
  %294 = vmatprep.mubr.bf16.mxu0 0
  %295 = vmatmul.mubr.bf16.gmra.mrb[0].mxu0 %v189
  %v296 = vpop.f32.mrb[0].mxu0
  %v297 = vadd.f32 0.0, %v296
  %v298 = vpop.f32.mrb[0].mxu0
  %v299 = vpop.f32.mrb[0].mxu0
  %v300 = vpop.f32.mrb[0].mxu0
  %301 = vdwg.mxu0
  %v302 = vadd.f32 %v29, %v289
  %v303 = vadd.f32 %v30, %v292
  %v304 = vadd.f32 %v31, %v297
  %v305 = vld [vmem:[%s6] sm:$0x1]
  %v307 = vlaneseq
  %v308 = vshrl.u32 %v307, 7
  %v309 = vsub.s32 0, %v308
  %v310 = vrot.slane %v305, %v309
  %v312 = vadd.f32 %v302, %v310
  %v313 = vadd.f32 %v303, %v310
  %v314 = vadd.f32 %v304, %v310
  %315 = vst.msk [vmem:[%s7] sm:$0xff] %vm32, %v312
  %316 = vst.msk [vmem:[%s7 + $0x8] sm:$0xff] %vm32, %v313
  %317 = vst.msk [vmem:[%s7 + $0x10] sm:$0xff] %vm32, %v314
  // Predicated region
  $region30: #{_lambda_.5} parent=0 // pred_check
    _
  $region31: #{_lambda_.5} parent=0 // pred_check_branch
    %319 = sbr.rel (0) target = $region33
  $region32: #{_lambda_.5} parent=0 // pred_region
    _
  $region33: #{_lambda_.5} parent=0 // pred_fallthru
    _
  // Predicated region
  $region34: #{_lambda_.5} parent=0 // pred_check
    _
  $region35: #{_lambda_.5} parent=0 // pred_check_branch
    %321 = sbr.rel (0) target = $region37
  $region36: #{_lambda_.5} parent=0 // pred_region
    _
  $region37: #{_lambda_.5} parent=0 // pred_fallthru
    _

// kernel: _lambda_.4
$region0: #{_lambda_.4}
  #allocation0 [shape = 'u32[]', space=smem, size = 0x4, offset = 0x4, fixed_abs, tag = 'smem constant byte address 0x4 - core index']
  #allocation1 [shape = 'u32[144,128]{1,0:T(1,128)}', space=vmem, size = 0x12000, scoped, tag = 'internal scratch']
  #allocation2 [shape = 'bf16[12,32]{1,0:T(8,128)(2,1)}', space=vmem, size = 0x1000, scoped, tag = 'scratch operand']
  %s0 = inlined_call_operand.vmem [shape: f32[2,12,32], index: 0, kind: input, shape index: {}]
  %s1 = inlined_call_operand.vmem [shape: f32[2,4,8], index: 1, kind: input, shape index: {}]
  %s2 = inlined_call_operand.vmem [shape: f32[1,32], index: 2, kind: input, shape index: {}]
  %s3 = inlined_call_operand.vmem [shape: f32[1,32], index: 3, kind: input, shape index: {}]
  %s4 = inlined_call_operand.vmem [shape: bf16[32,96], index: 4, kind: input, shape index: {}]
  %s5 = inlined_call_operand.vmem [shape: f32[1,96], index: 5, kind: input, shape index: {}]
  %s6 = inlined_call_operand.vmem [shape: bf16[32,32], index: 6, kind: input, shape index: {}]
  %s7 = inlined_call_operand.vmem [shape: f32[1,32], index: 7, kind: input, shape index: {}]
  %s8 = inlined_call_operand.vmem [shape: bf16[32,32], index: 8, kind: input, shape index: {}]
  %s9 = inlined_call_operand.vmem [shape: f32[1,32], index: 9, kind: input, shape index: {}]
  %s10 = inlined_call_operand.vmem [shape: f32[2,12,32], index: 10, kind: output, shape index: {}]
  %s11 = sld [smem:[#allocation0]]
  $region73: #{_lambda_.4} parent=0
    _
  %s13 = ssub.s32 1, %s11
  %s14 = scalar_select 0, %s13, %s11
  loop: start=0, step=1, limit=4
  $region2: #{_lambda_.4} parent=0 // loop_pre_header
    _
  $region3: #{_lambda_.4} parent=0 // loop_header
    %s16 = sphi 0, %s20
    %p17 = scmp.ge.s32.totalorder %s16, 4
    %s26 = sphi 0, %s28
    %s29 = sphi 0, %s26
    %s30 = sphi 0, %s29
    %s46 = sphi 0, %s30
    %s52 = sphi 0, %s54
    %s55 = sphi 0, %s52
    %s56 = sphi 0, %s55
    %s72 = sphi 0, %s56
    %s76 = sphi 0, %s76
    %s78 = sphi 0, %s76
    %s79 = sphi 0, %s78
    %s93 = sphi 0, %s79
    %s97 = sphi 0, %s97
    %s99 = sphi 0, %s97
    %s100 = sphi 0, %s99
    %s114 = sphi 0, %s100
    %s118 = sphi 0, %s118
    %s120 = sphi 0, %s118
    %s121 = sphi 0, %s120
    %s135 = sphi 0, %s121
    %s139 = sphi 0, %s139
    %s141 = sphi 0, %s139
    %s142 = sphi 0, %s141
    %s156 = sphi 0, %s142
    %s160 = sphi 0, %s160
    %s162 = sphi 0, %s160
    %s163 = sphi 0, %s162
    %s177 = sphi 0, %s163
    %s181 = sphi 0, %s181
    %s183 = sphi 0, %s181
    %s184 = sphi 0, %s183
    %s198 = sphi 0, %s184
    %s202 = sphi 0, %s202
    %s204 = sphi 0, %s202
    %s205 = sphi 0, %s204
    %s219 = sphi 0, %s205
    %s223 = sphi 0, %s223
    %s225 = sphi 0, %s223
    %s226 = sphi 0, %s225
    %s240 = sphi 0, %s226
    %s246 = sphi 0, %s248
    %s249 = sphi 0, %s246
    %s250 = sphi 0, %s249
    %s266 = sphi 0, %s250
  $region4: #{_lambda_.4} parent=0 // loop_header_branch
    %19 = sbr.rel (%p17) target = $region8
  $region5: #{_lambda_.4} parent=0 // loop_body
    %s21 = ssub.s32 %s16, 1
    %s22 = ssub.s32 %s16, 2
    %s23 = sadd.s32 %s16, 1
    %s24 = ssub.s32 %s16, %s23
    %p25 = scmp.eq.s32.totalorder %s24, 0
    %s27 = sadd.s32 %s26, 1
    %s28 = scalar_select %p25, %s26, %s27
    %p31 = pneg %p25
    %p32 = scmp.eq.s32.totalorder %s16, 1
    %p33 = por %p31, %p32
    %p34 = scmp.ne.s32.totalorder %s26, %s29
    %p35 = scmp.eq.s32.totalorder %s16, 0
    %p36 = por %p34, %p35
    %p37 = scmp.ne.s32.totalorder %s26, %s29
    %p38 = scmp.eq.s32.totalorder %s21, 1
    %p39 = por %p37, %p38
    %p40 = scmp.ne.s32.totalorder %s29, %s30
    %p41 = scmp.eq.s32.totalorder %s21, 0
    %p42 = por %p40, %p41
    %p43 = scmp.ne.s32.totalorder %s29, %s30
    %p44 = scmp.eq.s32.totalorder %s22, 1
    %p45 = por %p43, %p44
    %p47 = scmp.ne.s32.totalorder %s30, %s46
    %p48 = scmp.eq.s32.totalorder %s22, 0
    %p49 = por %p47, %p48
    %s50 = ssub.s32 %s16, %s23
    %p51 = scmp.eq.s32.totalorder %s50, 0
    %s53 = sadd.s32 %s52, 1
    %s54 = scalar_select %p51, %s52, %s53
    %p57 = pneg %p51
    %p58 = scmp.eq.s32.totalorder %s16, 1
    %p59 = por %p57, %p58
    %p60 = scmp.ne.s32.totalorder %s52, %s55
    %p61 = scmp.eq.s32.totalorder %s16, 0
    %p62 = por %p60, %p61
    %p63 = scmp.ne.s32.totalorder %s52, %s55
    %p64 = scmp.eq.s32.totalorder %s21, 1
    %p65 = por %p63, %p64
    %p66 = scmp.ne.s32.totalorder %s55, %s56
    %p67 = scmp.eq.s32.totalorder %s21, 0
    %p68 = por %p66, %p67
    %p69 = scmp.ne.s32.totalorder %s55, %s56
    %p70 = scmp.eq.s32.totalorder %s22, 1
    %p71 = por %p69, %p70
    %p73 = scmp.ne.s32.totalorder %s56, %s72
    %p74 = scmp.eq.s32.totalorder %s22, 0
    %p75 = por %p73, %p74
    %s77 = sadd.s32 %s76, 1
    %p80 = scmp.eq.s32.totalorder %s16, 1
    %p81 = scmp.ne.s32.totalorder %s76, %s78
    %p82 = scmp.eq.s32.totalorder %s16, 0
    %p83 = por %p81, %p82
    %p84 = scmp.ne.s32.totalorder %s76, %s78
    %p85 = scmp.eq.s32.totalorder %s21, 1
    %p86 = por %p84, %p85
    %p87 = scmp.ne.s32.totalorder %s78, %s79
    %p88 = scmp.eq.s32.totalorder %s21, 0
    %p89 = por %p87, %p88
    %p90 = scmp.ne.s32.totalorder %s78, %s79
    %p91 = scmp.eq.s32.totalorder %s22, 1
    %p92 = por %p90, %p91
    %p94 = scmp.ne.s32.totalorder %s79, %s93
    %p95 = scmp.eq.s32.totalorder %s22, 0
    %p96 = por %p94, %p95
    %s98 = sadd.s32 %s97, 1
    %p101 = scmp.eq.s32.totalorder %s16, 1
    %p102 = scmp.ne.s32.totalorder %s97, %s99
    %p103 = scmp.eq.s32.totalorder %s16, 0
    %p104 = por %p102, %p103
    %p105 = scmp.ne.s32.totalorder %s97, %s99
    %p106 = scmp.eq.s32.totalorder %s21, 1
    %p107 = por %p105, %p106
    %p108 = scmp.ne.s32.totalorder %s99, %s100
    %p109 = scmp.eq.s32.totalorder %s21, 0
    %p110 = por %p108, %p109
    %p111 = scmp.ne.s32.totalorder %s99, %s100
    %p112 = scmp.eq.s32.totalorder %s22, 1
    %p113 = por %p111, %p112
    %p115 = scmp.ne.s32.totalorder %s100, %s114
    %p116 = scmp.eq.s32.totalorder %s22, 0
    %p117 = por %p115, %p116
    %s119 = sadd.s32 %s118, 1
    %p122 = scmp.eq.s32.totalorder %s16, 1
    %p123 = scmp.ne.s32.totalorder %s118, %s120
    %p124 = scmp.eq.s32.totalorder %s16, 0
    %p125 = por %p123, %p124
    %p126 = scmp.ne.s32.totalorder %s118, %s120
    %p127 = scmp.eq.s32.totalorder %s21, 1
    %p128 = por %p126, %p127
    %p129 = scmp.ne.s32.totalorder %s120, %s121
    %p130 = scmp.eq.s32.totalorder %s21, 0
    %p131 = por %p129, %p130
    %p132 = scmp.ne.s32.totalorder %s120, %s121
    %p133 = scmp.eq.s32.totalorder %s22, 1
    %p134 = por %p132, %p133
    %p136 = scmp.ne.s32.totalorder %s121, %s135
    %p137 = scmp.eq.s32.totalorder %s22, 0
    %p138 = por %p136, %p137
    %s140 = sadd.s32 %s139, 1
    %p143 = scmp.eq.s32.totalorder %s16, 1
    %p144 = scmp.ne.s32.totalorder %s139, %s141
    %p145 = scmp.eq.s32.totalorder %s16, 0
    %p146 = por %p144, %p145
    %p147 = scmp.ne.s32.totalorder %s139, %s141
    %p148 = scmp.eq.s32.totalorder %s21, 1
    %p149 = por %p147, %p148
    %p150 = scmp.ne.s32.totalorder %s141, %s142
    %p151 = scmp.eq.s32.totalorder %s21, 0
    %p152 = por %p150, %p151
    %p153 = scmp.ne.s32.totalorder %s141, %s142
    %p154 = scmp.eq.s32.totalorder %s22, 1
    %p155 = por %p153, %p154
    %p157 = scmp.ne.s32.totalorder %s142, %s156
    %p158 = scmp.eq.s32.totalorder %s22, 0
    %p159 = por %p157, %p158
    %s161 = sadd.s32 %s160, 1
    %p164 = scmp.eq.s32.totalorder %s16, 1
    %p165 = scmp.ne.s32.totalorder %s160, %s162
    %p166 = scmp.eq.s32.totalorder %s16, 0
    %p167 = por %p165, %p166
    %p168 = scmp.ne.s32.totalorder %s160, %s162
    %p169 = scmp.eq.s32.totalorder %s21, 1
    %p170 = por %p168, %p169
    %p171 = scmp.ne.s32.totalorder %s162, %s163
    %p172 = scmp.eq.s32.totalorder %s21, 0
    %p173 = por %p171, %p172
    %p174 = scmp.ne.s32.totalorder %s162, %s163
    %p175 = scmp.eq.s32.totalorder %s22, 1
    %p176 = por %p174, %p175
    %p178 = scmp.ne.s32.totalorder %s163, %s177
    %p179 = scmp.eq.s32.totalorder %s22, 0
    %p180 = por %p178, %p179
    %s182 = sadd.s32 %s181, 1
    %p185 = scmp.eq.s32.totalorder %s16, 1
    %p186 = scmp.ne.s32.totalorder %s181, %s183
    %p187 = scmp.eq.s32.totalorder %s16, 0
    %p188 = por %p186, %p187
    %p189 = scmp.ne.s32.totalorder %s181, %s183
    %p190 = scmp.eq.s32.totalorder %s21, 1
    %p191 = por %p189, %p190
    %p192 = scmp.ne.s32.totalorder %s183, %s184
    %p193 = scmp.eq.s32.totalorder %s21, 0
    %p194 = por %p192, %p193
    %p195 = scmp.ne.s32.totalorder %s183, %s184
    %p196 = scmp.eq.s32.totalorder %s22, 1
    %p197 = por %p195, %p196
    %p199 = scmp.ne.s32.totalorder %s184, %s198
    %p200 = scmp.eq.s32.totalorder %s22, 0
    %p201 = por %p199, %p200
    %s203 = sadd.s32 %s202, 1
    %p206 = scmp.eq.s32.totalorder %s16, 1
    %p207 = scmp.ne.s32.totalorder %s202, %s204
    %p208 = scmp.eq.s32.totalorder %s16, 0
    %p209 = por %p207, %p208
    %p210 = scmp.ne.s32.totalorder %s202, %s204
    %p211 = scmp.eq.s32.totalorder %s21, 1
    %p212 = por %p210, %p211
    %p213 = scmp.ne.s32.totalorder %s204, %s205
    %p214 = scmp.eq.s32.totalorder %s21, 0
    %p215 = por %p213, %p214
    %p216 = scmp.ne.s32.totalorder %s204, %s205
    %p217 = scmp.eq.s32.totalorder %s22, 1
    %p218 = por %p216, %p217
    %p220 = scmp.ne.s32.totalorder %s205, %s219
    %p221 = scmp.eq.s32.totalorder %s22, 0
    %p222 = por %p220, %p221
    %s224 = sadd.s32 %s223, 1
    %p227 = scmp.eq.s32.totalorder %s16, 1
    %p228 = scmp.ne.s32.totalorder %s223, %s225
    %p229 = scmp.eq.s32.totalorder %s16, 0
    %p230 = por %p228, %p229
    %p231 = scmp.ne.s32.totalorder %s223, %s225
    %p232 = scmp.eq.s32.totalorder %s21, 1
    %p233 = por %p231, %p232
    %p234 = scmp.ne.s32.totalorder %s225, %s226
    %p235 = scmp.eq.s32.totalorder %s21, 0
    %p236 = por %p234, %p235
    %p237 = scmp.ne.s32.totalorder %s225, %s226
    %p238 = scmp.eq.s32.totalorder %s22, 1
    %p239 = por %p237, %p238
    %p241 = scmp.ne.s32.totalorder %s226, %s240
    %p242 = scmp.eq.s32.totalorder %s22, 0
    %p243 = por %p241, %p242
    %s244 = ssub.s32 %s16, %s23
    %p245 = scmp.eq.s32.totalorder %s244, 0
    %s247 = sadd.s32 %s246, 1
    %s248 = scalar_select %p245, %s246, %s247
    %p251 = pneg %p245
    %p252 = scmp.eq.s32.totalorder %s16, 1
    %p253 = por %p251, %p252
    %p254 = scmp.ne.s32.totalorder %s246, %s249
    %p255 = scmp.eq.s32.totalorder %s16, 0
    %p256 = por %p254, %p255
    %p257 = scmp.ne.s32.totalorder %s246, %s249
    %p258 = scmp.eq.s32.totalorder %s21, 1
    %p259 = por %p257, %p258
    %p260 = scmp.ne.s32.totalorder %s249, %s250
    %p261 = scmp.eq.s32.totalorder %s21, 0
    %p262 = por %p260, %p261
    %p263 = scmp.ne.s32.totalorder %s249, %s250
    %p264 = scmp.eq.s32.totalorder %s22, 1
    %p265 = por %p263, %p264
    %p267 = scmp.ne.s32.totalorder %s250, %s266
    %p268 = scmp.eq.s32.totalorder %s22, 0
    %p269 = por %p267, %p268
    %p270 = scmp.le.s32.totalorder 1, %s16
    %p271 = scmp.lt.s32.totalorder %s16, 3
    %p272 = pnand %p270, %p271
    %p273 = pneg %p272
    // Predicated region
    $region9: #{_lambda_.4} parent=5 // pred_check
      _
    $region10: #{_lambda_.4} parent=5 // pred_check_branch
      %275 = sbr.rel (%p272) target = $region12
    $region11: #{_lambda_.4} parent=5 // pred_region
      %s276 = ssub.s32 %s16, 1
      // Predicated region
      $region13: #{_lambda_.4} parent=11 // pred_check
        %p277 = pneg %p89
      $region14: #{_lambda_.4} parent=11 // pred_check_branch
        %279 = sbr.rel (%p277) target = $region16
      $region15: #{_lambda_.4} parent=11 // pred_region
        _
      $region16: #{_lambda_.4} parent=11 // pred_fallthru
        _
      // Predicated region
      $region17: #{_lambda_.4} parent=11 // pred_check
        %p280 = pneg %p110
      $region18: #{_lambda_.4} parent=11 // pred_check_branch
        %282 = sbr.rel (%p280) target = $region20
      $region19: #{_lambda_.4} parent=11 // pred_region
        _
      $region20: #{_lambda_.4} parent=11 // pred_fallthru
        _
      // Predicated region
      $region21: #{_lambda_.4} parent=11 // pred_check
        %p283 = pneg %p131
      $region22: #{_lambda_.4} parent=11 // pred_check_branch
        %285 = sbr.rel (%p283) target = $region24
      $region23: #{_lambda_.4} parent=11 // pred_region
        _
      $region24: #{_lambda_.4} parent=11 // pred_fallthru
        _
      // Predicated region
      $region25: #{_lambda_.4} parent=11 // pred_check
        %p286 = pneg %p152
      $region26: #{_lambda_.4} parent=11 // pred_check_branch
        %288 = sbr.rel (%p286) target = $region28
      $region27: #{_lambda_.4} parent=11 // pred_region
        _
      $region28: #{_lambda_.4} parent=11 // pred_fallthru
        _
      // Predicated region
      $region29: #{_lambda_.4} parent=11 // pred_check
        %p289 = pneg %p173
      $region30: #{_lambda_.4} parent=11 // pred_check_branch
        %291 = sbr.rel (%p289) target = $region32
      $region31: #{_lambda_.4} parent=11 // pred_region
        _
      $region32: #{_lambda_.4} parent=11 // pred_fallthru
        _
      // Predicated region
      $region33: #{_lambda_.4} parent=11 // pred_check
        %p292 = pneg %p194
      $region34: #{_lambda_.4} parent=11 // pred_check_branch
        %294 = sbr.rel (%p292) target = $region36
      $region35: #{_lambda_.4} parent=11 // pred_region
        _
      $region36: #{_lambda_.4} parent=11 // pred_fallthru
        _
      // Predicated region
      $region37: #{_lambda_.4} parent=11 // pred_check
        %p295 = pneg %p215
      $region38: #{_lambda_.4} parent=11 // pred_check_branch
        %297 = sbr.rel (%p295) target = $region40
      $region39: #{_lambda_.4} parent=11 // pred_region
        _
      $region40: #{_lambda_.4} parent=11 // pred_fallthru
        _
      // Predicated region
      $region41: #{_lambda_.4} parent=11 // pred_check
        %p298 = pneg %p236
      $region42: #{_lambda_.4} parent=11 // pred_check_branch
        %300 = sbr.rel (%p298) target = $region44
      $region43: #{_lambda_.4} parent=11 // pred_region
        _
      $region44: #{_lambda_.4} parent=11 // pred_fallthru
        _
    $region12: #{_lambda_.4} parent=5 // pred_fallthru
      _
    %p301 = scmp.lt.s32.totalorder %s16, 2
    // Predicated region
    $region45: #{_lambda_.4} parent=5 // pred_check
      %p302 = pneg %p301
    $region46: #{_lambda_.4} parent=5 // pred_check_branch
      %304 = sbr.rel (%p302) target = $region48
    $region47: #{_lambda_.4} parent=5 // pred_region
      // Predicated region
      $region49: #{_lambda_.4} parent=47 // pred_check
        %p305 = pneg %p36
      $region50: #{_lambda_.4} parent=47 // pred_check_branch
        %307 = sbr.rel (%p305) target = $region52
      $region51: #{_lambda_.4} parent=47 // pred_region
        %p308 = scmp.lt.s32.totalorder %s16, 1
        %s309 = scalar_select %p308, %s16, 1
        %s310 = smul.addr %s309, 2
        %s311 = smul.addr %s310, 8
        %s312 = scalar_lea.vmem %s0, %s311
      $region52: #{_lambda_.4} parent=47 // pred_fallthru
        _
      // Predicated region
      $region53: #{_lambda_.4} parent=47 // pred_check
        %p313 = pneg %p62
      $region54: #{_lambda_.4} parent=47 // pred_check_branch
        %315 = sbr.rel (%p313) target = $region56
      $region55: #{_lambda_.4} parent=47 // pred_region
        %p316 = scmp.lt.s32.totalorder %s16, 1
        %s317 = scalar_select %p316, %s16, 1
        %s318 = smul.addr %s317, 4
        %s319 = scalar_lea.vmem %s1, %s318
      $region56: #{_lambda_.4} parent=47 // pred_fallthru
        _
    $region48: #{_lambda_.4} parent=5 // pred_fallthru
      _
    %p320 = scmp.le.s32.totalorder 1, %s16
    %p321 = scmp.lt.s32.totalorder %s16, 3
    %p322 = pnand %p320, %p321
    %p323 = pneg %p322
    // Predicated region
    $region57: #{_lambda_.4} parent=5 // pred_check
      _
    $region58: #{_lambda_.4} parent=5 // pred_check_branch
      %325 = sbr.rel (%p322) target = $region60
    $region59: #{_lambda_.4} parent=5 // pred_region
      %s326 = ssub.s32 %s16, 1
      %p327 = scmp.lt.s32.totalorder %s21, 1
      %s328 = scalar_select %p327, %s21, 1
      %s329 = smul.addr %s328, 2
      %s330 = smul.addr %s329, 8
      %s331 = scalar_lea.vmem %s0, %s330
      %p332 = pneg %p42
      %p333 = pneg %p39
      %p334 = scmp.lt.s32.totalorder %s21, 1
      %s335 = scalar_select %p334, %s21, 1
      %s336 = smul.addr %s335, 4
      %s337 = scalar_lea.vmem %s1, %s336
      %p338 = pneg %p68
      %p339 = pneg %p65
      %p340 = pneg %p89
      %p341 = pneg %p86
      %p342 = pneg %p110
      %p343 = pneg %p107
      %p344 = pneg %p131
      %p345 = pneg %p128
      %p346 = pneg %p152
      %p347 = pneg %p149
      %p348 = pneg %p173
      %p349 = pneg %p170
      %p350 = pneg %p194
      %p351 = pneg %p191
      %p352 = pneg %p215
      %p353 = pneg %p212
      %p354 = pneg %p236
      %p355 = pneg %p233
      %p356 = pneg %p262
      %p357 = pneg %p259
      %p358 = scmp.lt.s32.totalorder %s21, 1
      %s359 = scalar_select %p358, %s21, 1
      %s360 = smul.addr %s359, 2
      %s361 = smul.addr %s360, 8
      %s362 = scalar_lea.vmem %s10, %s361
      %p363 = scmp.lt.s32.totalorder %s21, 1
      %s364 = scalar_select %p363, %s21, 1
      %s365 = smul.addr %s364, 2
      %s366 = smul.addr %s365, 8
      %s367 = scalar_lea.vmem %s0, %s366
      %p368 = scmp.lt.s32.totalorder %s21, 1
      %s369 = scalar_select %p368, %s21, 1
      %s370 = smul.addr %s369, 4
      %s371 = scalar_lea.vmem %s1, %s370
      %p372 = scmp.lt.s32.totalorder %s21, 1
      %s373 = scalar_select %p372, %s21, 1
      %s374 = smul.addr %s373, 2
      %s375 = smul.addr %s374, 8
      %s376 = scalar_lea.vmem %s10, %s375
      %v378 = vld [vmem:[%s367] sm:$0xff]
      %v379 = vld [vmem:[%s367 + $0x8] sm:$0xf]
      %vm380 = vcmask 261120
      %v381 = vsel %vm380, %v378, 0.0
      %382 = vadd.xlane.f32.xlu0 %v381
      %v383 = vpop.xlane.xlu0 %382
      %vm384 = vcmask 257024
      %v385 = vsel %vm384, %v379, 0.0
      %386 = vadd.xlane.f32.xlu0 %v385
      %v387 = vpop.xlane.xlu0 %386
      %v388 = vrcp.pop 32.0
      %v389 = vmul.f32 %v383, %v388
      %v390 = vmul.f32 %v387, %v388
      %v391 = vsub.f32 %v378, %v389
      %v392 = vsub.f32 %v379, %v390
      %v393 = vmul.f32 %v391, %v391
      %v394 = vmul.f32 %v392, %v392
      %v395 = vsel %vm380, %v393, 0.0
      %396 = vadd.xlane.f32.xlu0 %v395
      %v397 = vpop.xlane.xlu0 %396
      %v398 = vsel %vm384, %v394, 0.0
      %399 = vadd.xlane.f32.xlu0 %v398
      %v400 = vpop.xlane.xlu0 %399
      %v401 = vmul.f32 %v397, %v388
      %v402 = vmul.f32 %v400, %v388
      %v403 = vadd.f32 %v401, 1e-05
      %v404 = vadd.f32 %v402, 1e-05
      %v405 = vrsqrt.pop %v403
      %v406 = vrsqrt.pop %v404
      %v407 = vmul.f32 %v391, %v405
      %v408 = vmul.f32 %v392, %v406
      %v409 = vld [vmem:[%s2] sm:$0x1]
      %v411 = vlaneseq
      %v412 = vshrl.u32 %v411, 7
      %v413 = vsub.s32 0, %v412
      %v414 = vrot.slane %v409, %v413
      %v416 = vmul.f32 %v407, %v414
      %v417 = vmul.f32 %v408, %v414
      %v418 = vld [vmem:[%s3] sm:$0x1]
      %v420 = vlaneseq
      %v421 = vshrl.u32 %v420, 7
      %v422 = vsub.s32 0, %v421
      %v423 = vrot.slane %v418, %v422
      %v425 = vadd.f32 %v416, %v423
      %v426 = vadd.f32 %v417, %v423
      %v427 = vpack.c.bf16 %v426, %v425
      %v428 = vld [vmem:[%s4] sm:$0xf]
      %v429 = vld [vmem:[%s4 + $0x4] sm:$0xf]
      %v430 = vld [vmem:[%s4 + $0x8] sm:$0xf]
      %v431 = vld [vmem:[%s4 + $0xc] sm:$0xf]
      %v432 = vld [vmem:[%s5] sm:$0x1]
      %v434 = vlaneseq
      %v435 = vshrl.u32 %v434, 7
      %v436 = vsub.s32 0, %v435
      %v437 = vrot.slane %v432, %v436
      %v440 = vrot.slane %v427, 2
      %v445 = vunpack.c.l.b16 %v428
      %v446 = vunpack.c.l.b16 %v429
      %v447 = vunpack.c.l.b16 %v430
      %v448 = vunpack.c.l.b16 %v431
      %v449 = vpack.c.b16 %v446, %v445
      %v450 = vpack.c.b16 %v448, %v447
      %v454 = vsel %vm380, %v440, 0
      %456 = vmatprep.subr.bf16.mxu0 0
      %457 = vmatpush1.bf16.msra.mxu0 %v449
      %458 = vmatprep.subr.bf16.mxu0 0
      %459 = vmatpush1.bf16.msra.mxu0 %v450
      %460 = vmatprep.subr.bf16.mxu0 0
      %461 = vmatpush1.bf16.msra.mxu0 0
      %462 = vmatprep.subr.bf16.mxu0 0
      %463 = vmatpush1.bf16.msra.mxu0 0
      %464 = vmatprep.subr.bf16.mxu0 0
      %465 = vmatpush1.bf16.msra.mxu0 0
      %466 = vmatprep.subr.bf16.mxu0 0
      %467 = vmatpush1.bf16.msra.mxu0 0
      %468 = vmatprep.subr.bf16.mxu0 0
      %469 = vmatpush1.bf16.msra.mxu0 0
      %470 = vmatprep.subr.bf16.mxu0 0
      %471 = vmatpush1.bf16.msra.mxu0 0
      %472 = vmatprep.subr.bf16.mxu0 0
      %473 = vmatpush1.bf16.msra.mxu0 0
      %474 = vmatprep.subr.bf16.mxu0 0
      %475 = vmatpush1.bf16.msra.mxu0 0
      %476 = vmatprep.subr.bf16.mxu0 0
      %477 = vmatpush1.bf16.msra.mxu0 0
      %478 = vmatprep.subr.bf16.mxu0 0
      %479 = vmatpush1.bf16.msra.mxu0 0
      %480 = vmatprep.subr.bf16.mxu0 0
      %481 = vmatpush1.bf16.msra.mxu0 0
      %482 = vmatprep.subr.bf16.mxu0 0
      %483 = vmatpush1.bf16.msra.mxu0 0
      %484 = vmatprep.subr.bf16.mxu0 0
      %485 = vmatpush1.bf16.msra.mxu0 0
      %486 = vmatprep.subr.bf16.mxu0 0
      %487 = vmatpush1.bf16.msra.mxu0 0
      %488 = vmatprep.mubr.bf16.mxu0 0
      %489 = vmatmul.mubr.bf16.gmra.mrb[0].mxu0 %v454
      %v490 = vpop.f32.mrb[0].mxu0
      %v491 = vadd.f32 %v437, %v490
      %v492 = vpop.f32.mrb[0].mxu0
      %v493 = vpop.f32.mrb[0].mxu0
      %v494 = vpop.f32.mrb[0].mxu0
      %495 = vdwg.mxu0
      %v496 = vld [vmem:[%s6] sm:$0xf]
      %v497 = vld [vmem:[%s6 + $0x4] sm:$0xf]
      %v498 = vld [vmem:[%s6 + $0x8] sm:$0xf]
      %v499 = vld [vmem:[%s6 + $0xc] sm:$0xf]
      %v500 = vld [vmem:[%s7] sm:$0x1]
      %v502 = vlaneseq
      %v503 = vshrl.u32 %v502, 7
      %v504 = vsub.s32 0, %v503
      %v505 = vrot.slane %v500, %v504
      %v511 = vunpack.c.l.b16 %v496
      %v512 = vunpack.c.l.b16 %v497
      %v513 = vunpack.c.l.b16 %v498
      %v514 = vunpack.c.l.b16 %v499
      %v515 = vpack.c.b16 %v512, %v511
      %v516 = vpack.c.b16 %v514, %v513
      %v520 = vsel %vm380, %v427, 0
      %522 = vmatprep.subr.bf16.mxu0 0
      %523 = vmatpush1.bf16.msra.mxu0 %v515
      %524 = vmatprep.subr.bf16.mxu0 0
      %525 = vmatpush1.bf16.msra.mxu0 %v516
      %526 = vmatprep.subr.bf16.mxu0 0
      %527 = vmatpush1.bf16.msra.mxu0 0
      %528 = vmatprep.subr.bf16.mxu0 0
      %529 = vmatpush1.bf16.msra.mxu0 0
      %530 = vmatprep.subr.bf16.mxu0 0
      %531 = vmatpush1.bf16.msra.mxu0 0
      %532 = vmatprep.subr.bf16.mxu0 0
      %533 = vmatpush1.bf16.msra.mxu0 0
      %534 = vmatprep.subr.bf16.mxu0 0
      %535 = vmatpush1.bf16.msra.mxu0 0
      %536 = vmatprep.subr.bf16.mxu0 0
      %537 = vmatpush1.bf16.msra.mxu0 0
      %538 = vmatprep.subr.bf16.mxu0 0
      %539 = vmatpush1.bf16.msra.mxu0 0
      %540 = vmatprep.subr.bf16.mxu0 0
      %541 = vmatpush1.bf16.msra.mxu0 0
      %542 = vmatprep.subr.bf16.mxu0 0
      %543 = vmatpush1.bf16.msra.mxu0 0
      %544 = vmatprep.subr.bf16.mxu0 0
      %545 = vmatpush1.bf16.msra.mxu0 0
      %546 = vmatprep.subr.bf16.mxu0 0
      %547 = vmatpush1.bf16.msra.mxu0 0
      %548 = vmatprep.subr.bf16.mxu0 0
      %549 = vmatpush1.bf16.msra.mxu0 0
      %550 = vmatprep.subr.bf16.mxu0 0
      %551 = vmatpush1.bf16.msra.mxu0 0
      %552 = vmatprep.subr.bf16.mxu0 0
      %553 = vmatpush1.bf16.msra.mxu0 0
      %554 = vmatprep.mubr.bf16.mxu0 0
      %555 = vmatmul.mubr.bf16.gmra.mrb[0].mxu0 %v520
      %v556 = vpop.f32.mrb[0].mxu0
      %v557 = vadd.f32 %v505, %v556
      %v558 = vpop.f32.mrb[0].mxu0
      %v559 = vpop.f32.mrb[0].mxu0
      %v560 = vpop.f32.mrb[0].mxu0
      %561 = vdwg.mxu0
      %v563 = vrot.slane %v491, 4
      %vm565 = vcmask 1043456
      %v566 = vsel %vm565, %v557, %v563
      %v567 = vld [vmem:[%s371] sm:$0xf]
      %v568 = vsel %vm565, %v567, 0.0
      %v569 = vpack.c.bf16 %v563, %v566
      %v570 = vpack.c.bf16 %v491, %v491
      %572 = vrot.lane.b32.xlu0 %v570, 96
      %v573 = vpop.permute.xlu0 %572
      %vm574 = vcmask 64512
      %v576 = vsel %vm574, %v569, 0
      %v579 = vsel %vm574, %v573, 0
      %581 = vmatprep.subr.bf16.mxu0 0
      %582 = vmatpush1.bf16.xpose.msra.mxu0 %v579
      %583 = vmatprep.subr.bf16.mxu0 0
      %584 = vmatpush1.bf16.xpose.msra.mxu0 0
      %585 = vmatprep.subr.bf16.mxu0 0
      %586 = vmatpush1.bf16.xpose.msra.mxu0 0
      %587 = vmatprep.subr.bf16.mxu0 0
      %588 = vmatpush1.bf16.xpose.msra.mxu0 0
      %589 = vmatprep.subr.bf16.mxu0 0
      %590 = vmatpush1.bf16.xpose.msra.mxu0 0
      %591 = vmatprep.subr.bf16.mxu0 0
      %592 = vmatpush1.bf16.xpose.msra.mxu0 0
      %593 = vmatprep.subr.bf16.mxu0 0
      %594 = vmatpush1.bf16.xpose.msra.mxu0 0
      %595 = vmatprep.subr.bf16.mxu0 0
      %596 = vmatpush1.bf16.xpose.msra.mxu0 0
      %597 = vmatprep.subr.bf16.mxu0 0
      %598 = vmatpush1.bf16.xpose.msra.mxu0 0
      %599 = vmatprep.subr.bf16.mxu0 0
      %600 = vmatpush1.bf16.xpose.msra.mxu0 0
      %601 = vmatprep.subr.bf16.mxu0 0
      %602 = vmatpush1.bf16.xpose.msra.mxu0 0
      %603 = vmatprep.subr.bf16.mxu0 0
      %604 = vmatpush1.bf16.xpose.msra.mxu0 0
      %605 = vmatprep.subr.bf16.mxu0 0
      %606 = vmatpush1.bf16.xpose.msra.mxu0 0
      %607 = vmatprep.subr.bf16.mxu0 0
      %608 = vmatpush1.bf16.xpose.msra.mxu0 0
      %609 = vmatprep.subr.bf16.mxu0 0
      %610 = vmatpush1.bf16.xpose.msra.mxu0 0
      %611 = vmatprep.subr.bf16.mxu0 0
      %612 = vmatpush1.bf16.xpose.msra.mxu0 0
      %613 = vmatprep.mubr.bf16.mxu0 0
      %614 = vmatmul.mubr.bf16.gmra.mrb[0].mxu0 %v576
      %v615 = vpop.f32.mrb[0].mxu0
      %v616 = vadd.f32 %v568, %v615
      %v617 = vpop.f32.mrb[0].mxu0
      %v618 = vpop.f32.mrb[0].mxu0
      %v619 = vadd.f32 0.0, %v618
      %v620 = vpop.f32.mrb[0].mxu0
      %621 = vdwg.mxu0
      %v622 = vsel %vm574, %v616, -inf
      %623 = vmax.xlane.f32.xlu0 %v622
      %v624 = vpop.xlane.xlu0 %623
      %vm625 = vcmask 60416
      %v626 = vsel %vm625, %v619, -inf
      %627 = vmax.xlane.f32.xlu0 %v626
      %v628 = vpop.xlane.xlu0 %627
      %v629 = vsub.f32 %v616, %v624
      %v630 = vsub.f32 %v619, %v628
      %v631 = vmul.f32 %v629, 1.442695
      %v632 = vpow.pop %v631
      %v633 = vmul.f32 %v630, 1.442695
      %v634 = vpow.pop %v633
      %v635 = vsel %vm574, %v632, 0.0
      %636 = vadd.xlane.f32.xlu0 %v635
      %v637 = vpop.xlane.xlu0 %636
      %v638 = vsel %vm625, %v634, 0.0
      %639 = vadd.xlane.f32.xlu0 %v638
      %v640 = vpop.xlane.xlu0 %639
      %v641 = vpack.c.bf16 %v634, %v632
      %642 = vrot.lane.b32.xlu0 %v570, 64
      %v643 = vpop.permute.xlu0 %642
      %v645 = vsel %vm574, %v641, 0
      %v648 = vsel %vm565, %v643, 0
      %650 = vmatprep.subr.bf16.mxu0 0
      %651 = vmatpush1.bf16.msra.mxu0 %v648
      %652 = vmatprep.subr.bf16.mxu0 0
      %653 = vmatpush1.bf16.msra.mxu0 0
      %654 = vmatprep.subr.bf16.mxu0 0
      %655 = vmatpush1.bf16.msra.mxu0 0
      %656 = vmatprep.subr.bf16.mxu0 0
      %657 = vmatpush1.bf16.msra.mxu0 0
      %658 = vmatprep.subr.bf16.mxu0 0
      %659 = vmatpush1.bf16.msra.mxu0 0
      %660 = vmatprep.subr.bf16.mxu0 0
      %661 = vmatpush1.bf16.msra.mxu0 0
      %662 = vmatprep.subr.bf16.mxu0 0
      %663 = vmatpush1.bf16.msra.mxu0 0
      %664 = vmatprep.subr.bf16.mxu0 0
      %665 = vmatpush1.bf16.msra.mxu0 0
      %666 = vmatprep.subr.bf16.mxu0 0
      %667 = vmatpush1.bf16.msra.mxu0 0
      %668 = vmatprep.subr.bf16.mxu0 0
      %669 = vmatpush1.bf16.msra.mxu0 0
      %670 = vmatprep.subr.bf16.mxu0 0
      %671 = vmatpush1.bf16.msra.mxu0 0
      %672 = vmatprep.subr.bf16.mxu0 0
      %673 = vmatpush1.bf16.msra.mxu0 0
      %674 = vmatprep.subr.bf16.mxu0 0
      %675 = vmatpush1.bf16.msra.mxu0 0
      %676 = vmatprep.subr.bf16.mxu0 0
      %677 = vmatpush1.bf16.msra.mxu0 0
      %678 = vmatprep.subr.bf16.mxu0 0
      %679 = vmatpush1.bf16.msra.mxu0 0
      %680 = vmatprep.subr.bf16.mxu0 0
      %681 = vmatpush1.bf16.msra.mxu0 0
      %682 = vmatprep.mubr.bf16.mxu0 0
      %683 = vmatmul.mubr.bf16.gmra.mrb[0].mxu0 %v645
      %v684 = vpop.f32.mrb[0].mxu0
      %v685 = vadd.f32 0.0, %v684
      %v686 = vpop.f32.mrb[0].mxu0
      %v687 = vpop.f32.mrb[0].mxu0
      %v688 = vadd.f32 0.0, %v687
      %v689 = vpop.f32.mrb[0].mxu0
      %690 = vdwg.mxu0
      %v691 = vrcp.pop %v637
      %v692 = vrcp.pop %v640
      %v693 = vmul.f32 %v685, %v691
      %v694 = vmul.f32 %v688, %v692
      %v695 = vpack.c.bf16 %v694, %v693
      %v697 = vunpack.c.l.b16 %v695
      %v698 = vunpack.c.h.b16 %v695
      %v699 = vpack.c.b16 %v697, %v697
      %v700 = vpack.c.b16 %v698, %v698
      %703 = vst.msk [vmem:[#allocation2] sm:$0xf] %vm625, %v699
      %vm704 = vcmask 58368
      %705 = vst.msk [vmem:[#allocation2 + $0x4] sm:$0x3] %vm704, %v700
      %707 = vrot.lane.b32.xlu0 %v569, 120
      %v708 = vpop.permute.xlu0 %707
      %709 = vrot.lane.b32.xlu0 %v570, 88
      %v710 = vpop.permute.xlu0 %709
      %v712 = vsel %vm574, %v708, 0
      %v715 = vsel %vm574, %v710, 0
      %717 = vmatprep.subr.bf16.mxu0 0
      %718 = vmatpush1.bf16.xpose.msra.mxu0 %v715
      %719 = vmatprep.subr.bf16.mxu0 0
      %720 = vmatpush1.bf16.xpose.msra.mxu0 0
      %721 = vmatprep.subr.bf16.mxu0 0
      %722 = vmatpush1.bf16.xpose.msra.mxu0 0
      %723 = vmatprep.subr.bf16.mxu0 0
      %724 = vmatpush1.bf16.xpose.msra.mxu0 0
      %725 = vmatprep.subr.bf16.mxu0 0
      %726 = vmatpush1.bf16.xpose.msra.mxu0 0
      %727 = vmatprep.subr.bf16.mxu0 0
      %728 = vmatpush1.bf16.xpose.msra.mxu0 0
      %729 = vmatprep.subr.bf16.mxu0 0
      %730 = vmatpush1.bf16.xpose.msra.mxu0 0
      %731 = vmatprep.subr.bf16.mxu0 0
      %732 = vmatpush1.bf16.xpose.msra.mxu0 0
      %733 = vmatprep.subr.bf16.mxu0 0
      %734 = vmatpush1.bf16.xpose.msra.mxu0 0
      %735 = vmatprep.subr.bf16.mxu0 0
      %736 = vmatpush1.bf16.xpose.msra.mxu0 0
      %737 = vmatprep.subr.bf16.mxu0 0
      %738 = vmatpush1.bf16.xpose.msra.mxu0 0
      %739 = vmatprep.subr.bf16.mxu0 0
      %740 = vmatpush1.bf16.xpose.msra.mxu0 0
      %741 = vmatprep.subr.bf16.mxu0 0
      %742 = vmatpush1.bf16.xpose.msra.mxu0 0
      %743 = vmatprep.subr.bf16.mxu0 0
      %744 = vmatpush1.bf16.xpose.msra.mxu0 0
      %745 = vmatprep.subr.bf16.mxu0 0
      %746 = vmatpush1.bf16.xpose.msra.mxu0 0
      %747 = vmatprep.subr.bf16.mxu0 0
      %748 = vmatpush1.bf16.xpose.msra.mxu0 0
      %749 = vmatprep.mubr.bf16.mxu0 0
      %750 = vmatmul.mubr.bf16.gmra.mrb[0].mxu0 %v712
      %v751 = vpop.f32.mrb[0].mxu0
      %v752 = vadd.f32 %v568, %v751
      %v753 = vpop.f32.mrb[0].mxu0
      %v754 = vpop.f32.mrb[0].mxu0
      %v755 = vadd.f32 0.0, %v754
      %v756 = vpop.f32.mrb[0].mxu0
      %757 = vdwg.mxu0
      %v758 = vsel %vm574, %v752, -inf
      %759 = vmax.xlane.f32.xlu0 %v758
      %v760 = vpop.xlane.xlu0 %759
      %v761 = vsel %vm625, %v755, -inf
      %762 = vmax.xlane.f32.xlu0 %v761
      %v763 = vpop.xlane.xlu0 %762
      %v764 = vsub.f32 %v752, %v760
      %v765 = vsub.f32 %v755, %v763
      %v766 = vmul.f32 %v764, 1.442695
      %v767 = vpow.pop %v766
      %v768 = vmul.f32 %v765, 1.442695
      %v769 = vpow.pop %v768
      %v770 = vsel %vm574, %v767, 0.0
      %771 = vadd.xlane.f32.xlu0 %v770
      %v772 = vpop.xlane.xlu0 %771
      %v773 = vsel %vm625, %v769, 0.0
      %774 = vadd.xlane.f32.xlu0 %v773
      %v775 = vpop.xlane.xlu0 %774
      %v776 = vpack.c.bf16 %v769, %v767
      %777 = vrot.lane.b32.xlu0 %v570, 56
      %v778 = vpop.permute.xlu0 %777
      %v780 = vsel %vm574, %v776, 0
      %v783 = vsel %vm565, %v778, 0
      %785 = vmatprep.subr.bf16.mxu0 0
      %786 = vmatpush1.bf16.msra.mxu0 %v783
      %787 = vmatprep.subr.bf16.mxu0 0
      %788 = vmatpush1.bf16.msra.mxu0 0
      %789 = vmatprep.subr.bf16.mxu0 0
      %790 = vmatpush1.bf16.msra.mxu0 0
      %791 = vmatprep.subr.bf16.mxu0 0
      %792 = vmatpush1.bf16.msra.mxu0 0
      %793 = vmatprep.subr.bf16.mxu0 0
      %794 = vmatpush1.bf16.msra.mxu0 0
      %795 = vmatprep.subr.bf16.mxu0 0
      %796 = vmatpush1.bf16.msra.mxu0 0
      %797 = vmatprep.subr.bf16.mxu0 0
      %798 = vmatpush1.bf16.msra.mxu0 0
      %799 = vmatprep.subr.bf16.mxu0 0
      %800 = vmatpush1.bf16.msra.mxu0 0
      %801 = vmatprep.subr.bf16.mxu0 0
      %802 = vmatpush1.bf16.msra.mxu0 0
      %803 = vmatprep.subr.bf16.mxu0 0
      %804 = vmatpush1.bf16.msra.mxu0 0
      %805 = vmatprep.subr.bf16.mxu0 0
      %806 = vmatpush1.bf16.msra.mxu0 0
      %807 = vmatprep.subr.bf16.mxu0 0
      %808 = vmatpush1.bf16.msra.mxu0 0
      %809 = vmatprep.subr.bf16.mxu0 0
      %810 = vmatpush1.bf16.msra.mxu0 0
      %811 = vmatprep.subr.bf16.mxu0 0
      %812 = vmatpush1.bf16.msra.mxu0 0
      %813 = vmatprep.subr.bf16.mxu0 0
      %814 = vmatpush1.bf16.msra.mxu0 0
      %815 = vmatprep.subr.bf16.mxu0 0
      %816 = vmatpush1.bf16.msra.mxu0 0
      %817 = vmatprep.mubr.bf16.mxu0 0
      %818 = vmatmul.mubr.bf16.gmra.mrb[0].mxu0 %v780
      %v819 = vpop.f32.mrb[0].mxu0
      %v820 = vadd.f32 0.0, %v819
      %v821 = vpop.f32.mrb[0].mxu0
      %v822 = vpop.f32.mrb[0].mxu0
      %v823 = vadd.f32 0.0, %v822
      %v824 = vpop.f32.mrb[0].mxu0
      %825 = vdwg.mxu0
      %v826 = vrcp.pop %v772
      %v827 = vrcp.pop %v775
      %v828 = vmul.f32 %v820, %v826
      %v829 = vmul.f32 %v823, %v827
      %v830 = vpack.c.bf16 %v829, %v828
      %v832 = vunpack.c.l.b16 %v830
      %v833 = vunpack.c.h.b16 %v830
      %v834 = vpack.c.b16 %v832, %v832
      %v835 = vpack.c.b16 %v833, %v833
      %836 = vrot.lane.b32.xlu0 %v834, 8
      %v837 = vpop.permute.xlu0 %836
      %838 = vrot.lane.b32.xlu0 %v835, 8
      %v839 = vpop.permute.xlu0 %838
      %vm842 = vcmask 126016
      %843 = vst.msk [vmem:[#allocation2] sm:$0xf] %vm842, %v837
      %vm844 = vcmask 123968
      %845 = vst.msk [vmem:[#allocation2 + $0x4] sm:$0x3] %vm844, %v839
      %846 = vrot.lane.b32.xlu0 %v569, 112
      %v847 = vpop.permute.xlu0 %846
      %848 = vrot.lane.b32.xlu0 %v570, 80
      %v849 = vpop.permute.xlu0 %848
      %v851 = vsel %vm574, %v847, 0
      %v854 = vsel %vm574, %v849, 0
      %856 = vmatprep.subr.bf16.mxu0 0
      %857 = vmatpush1.bf16.xpose.msra.mxu0 %v854
      %858 = vmatprep.subr.bf16.mxu0 0
      %859 = vmatpush1.bf16.xpose.msra.mxu0 0
      %860 = vmatprep.subr.bf16.mxu0 0
      %861 = vmatpush1.bf16.xpose.msra.mxu0 0
      %862 = vmatprep.subr.bf16.mxu0 0
      %863 = vmatpush1.bf16.xpose.msra.mxu0 0
      %864 = vmatprep.subr.bf16.mxu0 0
      %865 = vmatpush1.bf16.xpose.msra.mxu0 0
      %866 = vmatprep.subr.bf16.mxu0 0
      %867 = vmatpush1.bf16.xpose.msra.mxu0 0
      %868 = vmatprep.subr.bf16.mxu0 0
      %869 = vmatpush1.bf16.xpose.msra.mxu0 0
      %870 = vmatprep.subr.bf16.mxu0 0
      %871 = vmatpush1.bf16.xpose.msra.mxu0 0
      %872 = vmatprep.subr.bf16.mxu0 0
      %873 = vmatpush1.bf16.xpose.msra.mxu0 0
      %874 = vmatprep.subr.bf16.mxu0 0
      %875 = vmatpush1.bf16.xpose.msra.mxu0 0
      %876 = vmatprep.subr.bf16.mxu0 0
      %877 = vmatpush1.bf16.xpose.msra.mxu0 0
      %878 = vmatprep.subr.bf16.mxu0 0
      %879 = vmatpush1.bf16.xpose.msra.mxu0 0
      %880 = vmatprep.subr.bf16.mxu0 0
      %881 = vmatpush1.bf16.xpose.msra.mxu0 0
      %882 = vmatprep.subr.bf16.mxu0 0
      %883 = vmatpush1.bf16.xpose.msra.mxu0 0
      %884 = vmatprep.subr.bf16.mxu0 0
      %885 = vmatpush1.bf16.xpose.msra.mxu0 0
      %886 = vmatprep.subr.bf16.mxu0 0
      %887 = vmatpush1.bf16.xpose.msra.mxu0 0
      %888 = vmatprep.mubr.bf16.mxu0 0
      %889 = vmatmul.mubr.bf16.gmra.mrb[0].mxu0 %v851
      %v890 = vpop.f32.mrb[0].mxu0
      %v891 = vadd.f32 %v568, %v890
      %v892 = vpop.f32.mrb[0].mxu0
      %v893 = vpop.f32.mrb[0].mxu0
      %v894 = vadd.f32 0.0, %v893
      %v895 = vpop.f32.mrb[0].mxu0
      %896 = vdwg.mxu0
      %v897 = vsel %vm574, %v891, -inf
      %898 = vmax.xlane.f32.xlu0 %v897
      %v899 = vpop.xlane.xlu0 %898
      %v900 = vsel %vm625, %v894, -inf
      %901 = vmax.xlane.f32.xlu0 %v900
      %v902 = vpop.xlane.xlu0 %901
      %v903 = vsub.f32 %v891, %v899
      %v904 = vsub.f32 %v894, %v902
      %v905 = vmul.f32 %v903, 1.442695
      %v906 = vpow.pop %v905
      %v907 = vmul.f32 %v904, 1.442695
      %v908 = vpow.pop %v907
      %v909 = vsel %vm574, %v906, 0.0
      %910 = vadd.xlane.f32.xlu0 %v909
      %v911 = vpop.xlane.xlu0 %910
      %v912 = vsel %vm625, %v908, 0.0
      %913 = vadd.xlane.f32.xlu0 %v912
      %v914 = vpop.xlane.xlu0 %913
      %v915 = vpack.c.bf16 %v908, %v906
      %916 = vrot.lane.b32.xlu0 %v570, 48
      %v917 = vpop.permute.xlu0 %916
      %v919 = vsel %vm574, %v915, 0
      %v922 = vsel %vm565, %v917, 0
      %924 = vmatprep.subr.bf16.mxu0 0
      %925 = vmatpush1.bf16.msra.mxu0 %v922
      %926 = vmatprep.subr.bf16.mxu0 0
      %927 = vmatpush1.bf16.msra.mxu0 0
      %928 = vmatprep.subr.bf16.mxu0 0
      %929 = vmatpush1.bf16.msra.mxu0 0
      %930 = vmatprep.subr.bf16.mxu0 0
      %931 = vmatpush1.bf16.msra.mxu0 0
      %932 = vmatprep.subr.bf16.mxu0 0
      %933 = vmatpush1.bf16.msra.mxu0 0
      %934 = vmatprep.subr.bf16.mxu0 0
      %935 = vmatpush1.bf16.msra.mxu0 0
      %936 = vmatprep.subr.bf16.mxu0 0
      %937 = vmatpush1.bf16.msra.mxu0 0
      %938 = vmatprep.subr.bf16.mxu0 0
      %939 = vmatpush1.bf16.msra.mxu0 0
      %940 = vmatprep.subr.bf16.mxu0 0
      %941 = vmatpush1.bf16.msra.mxu0 0
      %942 = vmatprep.subr.bf16.mxu0 0
      %943 = vmatpush1.bf16.msra.mxu0 0
      %944 = vmatprep.subr.bf16.mxu0 0
      %945 = vmatpush1.bf16.msra.mxu0 0
      %946 = vmatprep.subr.bf16.mxu0 0
      %947 = vmatpush1.bf16.msra.mxu0 0
      %948 = vmatprep.subr.bf16.mxu0 0
      %949 = vmatpush1.bf16.msra.mxu0 0
      %950 = vmatprep.subr.bf16.mxu0 0
      %951 = vmatpush1.bf16.msra.mxu0 0
      %952 = vmatprep.subr.bf16.mxu0 0
      %953 = vmatpush1.bf16.msra.mxu0 0
      %954 = vmatprep.subr.bf16.mxu0 0
      %955 = vmatpush1.bf16.msra.mxu0 0
      %956 = vmatprep.mubr.bf16.mxu0 0
      %957 = vmatmul.mubr.bf16.gmra.mrb[0].mxu0 %v919
      %v958 = vpop.f32.mrb[0].mxu0
      %v959 = vadd.f32 0.0, %v958
      %v960 = vpop.f32.mrb[0].mxu0
      %v961 = vpop.f32.mrb[0].mxu0
      %v962 = vadd.f32 0.0, %v961
      %v963 = vpop.f32.mrb[0].mxu0
      %964 = vdwg.mxu0
      %v965 = vrcp.pop %v911
      %v966 = vrcp.pop %v914
      %v967 = vmul.f32 %v959, %v965
      %v968 = vmul.f32 %v962, %v966
      %v969 = vpack.c.bf16 %v968, %v967
      %v971 = vunpack.c.l.b16 %v969
      %v972 = vunpack.c.h.b16 %v969
      %v973 = vpack.c.b16 %v971, %v971
      %v974 = vpack.c.b16 %v972, %v972
      %975 = vrot.lane.b32.xlu0 %v973, 16
      %v976 = vpop.permute.xlu0 %975
      %977 = vrot.lane.b32.xlu0 %v974, 16
      %v978 = vpop.permute.xlu0 %977
      %vm981 = vcmask 191616
      %982 = vst.msk [vmem:[#allocation2] sm:$0xf] %vm981, %v976
      %vm983 = vcmask 189568
      %984 = vst.msk [vmem:[#allocation2 + $0x4] sm:$0x3] %vm983, %v978
      %985 = vrot.lane.b32.xlu0 %v569, 104
      %v986 = vpop.permute.xlu0 %985
      %987 = vrot.lane.b32.xlu0 %v570, 72
      %v988 = vpop.permute.xlu0 %987
      %v990 = vsel %vm574, %v986, 0
      %v993 = vsel %vm574, %v988, 0
      %995 = vmatprep.subr.bf16.mxu0 0
      %996 = vmatpush1.bf16.xpose.msra.mxu0 %v993
      %997 = vmatprep.subr.bf16.mxu0 0
      %998 = vmatpush1.bf16.xpose.msra.mxu0 0
      %999 = vmatprep.subr.bf16.mxu0 0
      %1000 = vmatpush1.bf16.xpose.msra.mxu0 0
      %1001 = vmatprep.subr.bf16.mxu0 0
      %1002 = vmatpush1.bf16.xpose.msra.mxu0 0
      %1003 = vmatprep.subr.bf16.mxu0 0
      %1004 = vmatpush1.bf16.xpose.msra.mxu0 0
      %1005 = vmatprep.subr.bf16.mxu0 0
      %1006 = vmatpush1.bf16.xpose.msra.mxu0 0
      %1007 = vmatprep.subr.bf16.mxu0 0
      %1008 = vmatpush1.bf16.xpose.msra.mxu0 0
      %1009 = vmatprep.subr.bf16.mxu0 0
      %1010 = vmatpush1.bf16.xpose.msra.mxu0 0
      %1011 = vmatprep.subr.bf16.mxu0 0
      %1012 = vmatpush1.bf16.xpose.msra.mxu0 0
      %1013 = vmatprep.subr.bf16.mxu0 0
      %1014 = vmatpush1.bf16.xpose.msra.mxu0 0
      %1015 = vmatprep.subr.bf16.mxu0 0
      %1016 = vmatpush1.bf16.xpose.msra.mxu0 0
      %1017 = vmatprep.subr.bf16.mxu0 0
      %1018 = vmatpush1.bf16.xpose.msra.mxu0 0
      %1019 = vmatprep.subr.bf16.mxu0 0
      %1020 = vmatpush1.bf16.xpose.msra.mxu0 0
      %1021 = vmatprep.subr.bf16.mxu0 0
      %1022 = vmatpush1.bf16.xpose.msra.mxu0 0
      %1023 = vmatprep.subr.bf16.mxu0 0
      %1024 = vmatpush1.bf16.xpose.msra.mxu0 0
      %1025 = vmatprep.subr.bf16.mxu0 0
      %1026 = vmatpush1.bf16.xpose.msra.mxu0 0
      %1027 = vmatprep.mubr.bf16.mxu0 0
      %1028 = vmatmul.mubr.bf16.gmra.mrb[0].mxu0 %v990
      %v1029 = vpop.f32.mrb[0].mxu0
      %v1030 = vadd.f32 %v568, %v1029
      %v1031 = vpop.f32.mrb[0].mxu0
      %v1032 = vpop.f32.mrb[0].mxu0
      %v1033 = vadd.f32 0.0, %v1032
      %v1034 = vpop.f32.mrb[0].mxu0
      %1035 = vdwg.mxu0
      %v1036 = vsel %vm574, %v1030, -inf
      %1037 = vmax.xlane.f32.xlu0 %v1036
      %v1038 = vpop.xlane.xlu0 %1037
      %v1039 = vsel %vm625, %v1033, -inf
      %1040 = vmax.xlane.f32.xlu0 %v1039
      %v1041 = vpop.xlane.xlu0 %1040
      %v1042 = vsub.f32 %v1030, %v1038
      %v1043 = vsub.f32 %v1033, %v1041
      %v1044 = vmul.f32 %v1042, 1.442695
      %v1045 = vpow.pop %v1044
      %v1046 = vmul.f32 %v1043, 1.442695
      %v1047 = vpow.pop %v1046
      %v1048 = vsel %vm574, %v1045, 0.0
      %1049 = vadd.xlane.f32.xlu0 %v1048
      %v1050 = vpop.xlane.xlu0 %1049
      %v1051 = vsel %vm625, %v1047, 0.0
      %1052 = vadd.xlane.f32.xlu0 %v1051
      %v1053 = vpop.xlane.xlu0 %1052
      %v1054 = vpack.c.bf16 %v1047, %v1045
      %1055 = vrot.lane.b32.xlu0 %v570, 40
      %v1056 = vpop.permute.xlu0 %1055
      %v1058 = vsel %vm574, %v1054, 0
      %v1061 = vsel %vm565, %v1056, 0
      %1063 = vmatprep.subr.bf16.mxu0 0
      %1064 = vmatpush1.bf16.msra.mxu0 %v1061
      %1065 = vmatprep.subr.bf16.mxu0 0
      %1066 = vmatpush1.bf16.msra.mxu0 0
      %1067 = vmatprep.subr.bf16.mxu0 0
      %1068 = vmatpush1.bf16.msra.mxu0 0
      %1069 = vmatprep.subr.bf16.mxu0 0
      %1070 = vmatpush1.bf16.msra.mxu0 0
      %1071 = vmatprep.subr.bf16.mxu0 0
      %1072 = vmatpush1.bf16.msra.mxu0 0
      %1073 = vmatprep.subr.bf16.mxu0 0
      %1074 = vmatpush1.bf16.msra.mxu0 0
      %1075 = vmatprep.subr.bf16.mxu0 0
      %1076 = vmatpush1.bf16.msra.mxu0 0
      %1077 = vmatprep.subr.bf16.mxu0 0
      %1078 = vmatpush1.bf16.msra.mxu0 0
      %1079 = vmatprep.subr.bf16.mxu0 0
      %1080 = vmatpush1.bf16.msra.mxu0 0
      %1081 = vmatprep.subr.bf16.mxu0 0
      %1082 = vmatpush1.bf16.msra.mxu0 0
      %1083 = vmatprep.subr.bf16.mxu0 0
      %1084 = vmatpush1.bf16.msra.mxu0 0
      %1085 = vmatprep.subr.bf16.mxu0 0
      %1086 = vmatpush1.bf16.msra.mxu0 0
      %1087 = vmatprep.subr.bf16.mxu0 0
      %1088 = vmatpush1.bf16.msra.mxu0 0
      %1089 = vmatprep.subr.bf16.mxu0 0
      %1090 = vmatpush1.bf16.msra.mxu0 0
      %1091 = vmatprep.subr.bf16.mxu0 0
      %1092 = vmatpush1.bf16.msra.mxu0 0
      %1093 = vmatprep.subr.bf16.mxu0 0
      %1094 = vmatpush1.bf16.msra.mxu0 0
      %1095 = vmatprep.mubr.bf16.mxu0 0
      %1096 = vmatmul.mubr.bf16.gmra.mrb[0].mxu0 %v1058
      %v1097 = vpop.f32.mrb[0].mxu0
      %v1098 = vadd.f32 0.0, %v1097
      %v1099 = vpop.f32.mrb[0].mxu0
      %v1100 = vpop.f32.mrb[0].mxu0
      %v1101 = vadd.f32 0.0, %v1100
      %v1102 = vpop.f32.mrb[0].mxu0
      %1103 = vdwg.mxu0
      %v1104 = vrcp.pop %v1050
      %v1105 = vrcp.pop %v1053
      %v1106 = vmul.f32 %v1098, %v1104
      %v1107 = vmul.f32 %v1101, %v1105
      %v1108 = vpack.c.bf16 %v1107, %v1106
      %v1110 = vunpack.c.l.b16 %v1108
      %v1111 = vunpack.c.h.b16 %v1108
      %v1112 = vpack.c.b16 %v1110, %v1110
      %v1113 = vpack.c.b16 %v1111, %v1111
      %1114 = vrot.lane.b32.xlu0 %v1112, 24
      %v1115 = vpop.permute.xlu0 %1114
      %1116 = vrot.lane.b32.xlu0 %v1113, 24
      %v1117 = vpop.permute.xlu0 %1116
      %vm1120 = vcmask 257216
      %1121 = vst.msk [vmem:[#allocation2] sm:$0xf] %vm1120, %v1115
      %vm1122 = vcmask 255168
      %1123 = vst.msk [vmem:[#allocation2 + $0x4] sm:$0x3] %vm1122, %v1117
      %v1124 = vld [vmem:[#allocation2] sm:$0xf]
      %v1125 = vld [vmem:[#allocation2 + $0x4] sm:$0x3]
      %v1126 = vld [vmem:[%s8] sm:$0xf]
      %v1127 = vld [vmem:[%s8 + $0x4] sm:$0xf]
      %v1128 = vld [vmem:[%s8 + $0x8] sm:$0xf]
      %v1129 = vld [vmem:[%s8 + $0xc] sm:$0xf]
      %v1130 = vld [vmem:[%s9] sm:$0x1]
      %v1132 = vlaneseq
      %v1133 = vshrl.u32 %v1132, 7
      %v1134 = vsub.s32 0, %v1133
      %v1135 = vrot.slane %v1130, %v1134
      %v1139 = vunpack.c.l.b16 %v1124
      %v1140 = vunpack.c.l.b16 %v1125
      %v1141 = vpack.c.b16 %v1140, %v1139
      %v1146 = vunpack.c.l.b16 %v1126
      %v1147 = vunpack.c.l.b16 %v1127
      %v1148 = vunpack.c.l.b16 %v1128
      %v1149 = vunpack.c.l.b16 %v1129
      %v1150 = vpack.c.b16 %v1147, %v1146
      %v1151 = vpack.c.b16 %v1149, %v1148
      %v1155 = vsel %vm380, %v1141, 0
      %1157 = vmatprep.subr.bf16.mxu0 0
      %1158 = vmatpush1.bf16.msra.mxu0 %v1150
      %1159 = vmatprep.subr.bf16.mxu0 0
      %1160 = vmatpush1.bf16.msra.mxu0 %v1151
      %1161 = vmatprep.subr.bf16.mxu0 0
      %1162 = vmatpush1.bf16.msra.mxu0 0
      %1163 = vmatprep.subr.bf16.mxu0 0
      %1164 = vmatpush1.bf16.msra.mxu0 0
      %1165 = vmatprep.subr.bf16.mxu0 0
      %1166 = vmatpush1.bf16.msra.mxu0 0
      %1167 = vmatprep.subr.bf16.mxu0 0
      %1168 = vmatpush1.bf16.msra.mxu0 0
      %1169 = vmatprep.subr.bf16.mxu0 0
      %1170 = vmatpush1.bf16.msra.mxu0 0
      %1171 = vmatprep.subr.bf16.mxu0 0
      %1172 = vmatpush1.bf16.msra.mxu0 0
      %1173 = vmatprep.subr.bf16.mxu0 0
      %1174 = vmatpush1.bf16.msra.mxu0 0
      %1175 = vmatprep.subr.bf16.mxu0 0
      %1176 = vmatpush1.bf16.msra.mxu0 0
      %1177 = vmatprep.subr.bf16.mxu0 0
      %1178 = vmatpush1.bf16.msra.mxu0 0
      %1179 = vmatprep.subr.bf16.mxu0 0
      %1180 = vmatpush1.bf16.msra.mxu0 0
      %1181 = vmatprep.subr.bf16.mxu0 0
      %1182 = vmatpush1.bf16.msra.mxu0 0
      %1183 = vmatprep.subr.bf16.mxu0 0
      %1184 = vmatpush1.bf16.msra.mxu0 0
      %1185 = vmatprep.subr.bf16.mxu0 0
      %1186 = vmatpush1.bf16.msra.mxu0 0
      %1187 = vmatprep.subr.bf16.mxu0 0
      %1188 = vmatpush1.bf16.msra.mxu0 0
      %1189 = vmatprep.mubr.bf16.mxu0 0
      %1190 = vmatmul.mubr.bf16.gmra.mrb[0].mxu0 %v1155
      %v1191 = vpop.f32.mrb[0].mxu0
      %v1192 = vadd.f32 %v1135, %v1191
      %v1193 = vpop.f32.mrb[0].mxu0
      %v1194 = vpop.f32.mrb[0].mxu0
      %v1195 = vadd.f32 %v1135, %v1194
      %v1196 = vpop.f32.mrb[0].mxu0
      %1197 = vdwg.mxu0
      %v1198 = vadd.f32 %v378, %v1192
      %v1199 = vadd.f32 %v379, %v1195
      %1200 = vst.msk [vmem:[%s376] sm:$0xff] %vm380, %v1198
      %1201 = vst.msk [vmem:[%s376 + $0x8] sm:$0xf] %vm384, %v1199
      %p1202 = scmp.lt.s32.totalorder %s21, 1
      %s1203 = scalar_select %p1202, %s21, 1
      %s1204 = smul.addr %s1203, 2
      %s1205 = smul.addr %s1204, 8
      %s1206 = scalar_lea.vmem %s10, %s1205
      // Predicated region
      $region61: #{_lambda_.4} parent=59 // pred_check
        %p1207 = pneg %p259
      $region62: #{_lambda_.4} parent=59 // pred_check_branch
        %1209 = sbr.rel (%p1207) target = $region64
      $region63: #{_lambda_.4} parent=59 // pred_region
        _
      $region64: #{_lambda_.4} parent=59 // pred_fallthru
        _
    $region60: #{_lambda_.4} parent=5 // pred_fallthru
      _
    %p1210 = scmp.le.s32.totalorder 2, %s16
    // Predicated region
    $region65: #{_lambda_.4} parent=5 // pred_check
      %p1211 = pneg %p1210
    $region66: #{_lambda_.4} parent=5 // pred_check_branch
      %1213 = sbr.rel (%p1211) target = $region68
    $region67: #{_lambda_.4} parent=5 // pred_region
      %s1214 = ssub.s32 %s16, 2
      // Predicated region
      $region69: #{_lambda_.4} parent=67 // pred_check
        %p1215 = pneg %p265
      $region70: #{_lambda_.4} parent=67 // pred_check_branch
        %1217 = sbr.rel (%p1215) target = $region72
      $region71: #{_lambda_.4} parent=67 // pred_region
        %p1218 = scmp.lt.s32.totalorder %s22, 1
        %s1219 = scalar_select %p1218, %s22, 1
        %s1220 = smul.addr %s1219, 2
        %s1221 = smul.addr %s1220, 8
        %s1222 = scalar_lea.vmem %s10, %s1221
      $region72: #{_lambda_.4} parent=67 // pred_fallthru
        _
    $region68: #{_lambda_.4} parent=5 // pred_fallthru
      _
  $region6: #{_lambda_.4} parent=0 // loop_footer
    %s20 = sadd.s32 1, %s16
  $region7: #{_lambda_.4} parent=0 // loop_footer_branch
    %15 = sbr.rel target = $region3
  $region8: #{_lambda_.4} parent=0 // loop_exit
    _

</llo_original>
